<compile_context>
chip_gen: v6e
topology: v6e:2x2x1
jax: 0.10.0
libtpu: 0.0.40
codegen_flags: <defaults>
</compile_context>

<pallas_src>
import jax
import jax.numpy as jnp
from jax import lax
from jax.experimental import pallas as pl
from jax.experimental.pallas import tpu as pltpu

C = 32                    # out_ch
C4 = C // 4               # SE bottleneck channels
KERNELS = (50, 100, 200)
K_MAX = max(KERNELS)
PAD_MAX = K_MAX // 2
BN_EPS = 1e-5
S = 8                     # output positions folded into the matmul N dim per LHS row
D = ((S + K_MAX - 1 + S - 1) // S) * S   # 208 signal samples per LHS row
G = D // S                               # 26 shifted signal groups per row
N_LANES = S * 3 * C                      # 768 matmul N / lane width
BB_TARGET = 64            # max batch elements per grid step
VMEM_LIMIT_BYTES = 48 * 1024 * 1024      # < v7x's 64 MiB physical, > default scoped


def _erf_f32(x):
    # Eigen / XLA float32 rational approximation of erf (the same polynomial
    # XLA uses), so GELU matches torch.nn.GELU() (exact, erf-based) to f32
    # precision while only using VPU/EUP-friendly ops inside the kernel.
    x = jnp.clip(x, -4.0, 4.0)
    x2 = x * x
    p = x2 * (-2.72614225801306e-10) + 2.77068142495902e-08
    for c in (-2.10102402082508e-06, -5.69250639462346e-05,
              -7.34990630326855e-04, -2.95459980854025e-03,
              -1.60960333262415e-02):
        p = p * x2 + c
    p = p * x
    q = x2 * (-1.45660718464996e-05) + (-2.13374055278905e-04)
    for c in (-1.68282697438203e-03, -7.37332916720468e-03,
              -1.42647390514189e-02):
        q = q * x2 + c
    # p/q via EUP reciprocal (approx) + one Newton step: keeps the divide off
    # the VALU slot (binding unit on v7x) at ~1e-7 relative error.
    inv_q = pl.reciprocal(q, approx=True)
    inv_q = inv_q * (2.0 - q * inv_q)
    return p * inv_q


def _gelu(x):
    # Exact (erf-based) GELU, matching torch.nn.GELU() default.
    return 0.5 * x * (1.0 + _erf_f32(x * 0.7071067811865476))


def _msblock_kernel(lhs_ref, w_ref, shift_ref, lmask_ref, avg_ref,
                    se_w1_ref, se_w2_ref, out_ref):
    # lhs_ref : (bb*cs, D)  raw-signal chunk rows; row (b, c) = xp[b, S*c : S*c+D]
    # w_ref   : (D, S*3*C)  block-Toeplitz fused conv weight (BN scale folded in)
    # One MXU matmul -> all 3 branches x S output positions per row.
    y = jnp.dot(lhs_ref[...], w_ref[...], preferred_element_type=jnp.float32)
    y = _gelu(y + shift_ref[...])                            # BN shift + exact GELU
    cs = lmask_ref.shape[0]
    bb = y.shape[0] // cs
    # Masked mean over L: free reshape (cs % 8 == 0, rows grouped per batch
    # element), multiply by per-(chunk, position) 1/lout weights (0 on padded
    # positions), then chunk-sum on the VPU (replaces the old lmean matmul).
    s = jnp.sum(y.reshape(bb, cs, y.shape[1]) * lmask_ref[...], axis=1)   # (bb, S*3*C)
    # Sum over the S in-row positions + mean over the 3 branches (small matmul).
    p = jnp.dot(s, avg_ref[...], preferred_element_type=jnp.float32)      # (bb, C)
    # Squeeze-excite MLP (1x1 convs are channel matmuls), batched over bb rows.
    h = _gelu(jnp.dot(p, se_w1_ref[...], preferred_element_type=jnp.float32))       # (bb, C4)
    g = jax.nn.sigmoid(jnp.dot(h, se_w2_ref[...], preferred_element_type=jnp.float32))  # (bb, C)
    # mean_L(y * gate) == mean_L(y) * gate (gate constant along L).
    out_ref[0] = (p * g).astype(out_ref.dtype)
    # TODO(synk): nn.Dropout is identity in eval/inference mode; training-mode
    # RNG masking is intentionally not emitted.


def _tpu_blocking(batch, lout_pad):
    """Pick the batch block size bb from a per-generation VMEM budget."""
    vmem_cap = 64 * 1024 * 1024      # conservative default (v7x physical per-TC)
    n_cores = 1
    try:
        info = pltpu.get_tpu_info()
        vmem_cap = int(getattr(info, "vmem_capacity_bytes", vmem_cap))
        n_cores = int(getattr(info, "num_cores",
                              getattr(info, "tensorcore_count", 1)) or 1)
    except Exception:
        pass
    budget = min(max(vmem_cap // 2 - (4 << 20), 4 << 20), 28 << 20)
    # ~bytes of VMEM per batch element per step: double-buffered LHS rows
    # (lanes pad 208->256) + GELU-sized f32 temporaries.
    per_elem = lout_pad * 1800
    bb = max(1, min(batch, BB_TARGET, budget // per_elem))
    if n_cores >= 2 and batch >= 2:
        # Give each TensorCore at least one "parallel" grid step (v7x only;
        # single-TC chips keep one full tile to avoid an extra pipeline step).
        bb = min(bb, -(-batch // 2))
    return bb, -(-batch // bb)


def multiscale1d_block(x, conv_w, bn_gamma, bn_beta, bn_mean, bn_var, se_w1, se_w2):
    B, in_ch, L = x.shape
    assert in_ch == 1
    x1 = x[:, 0, :].astype(jnp.float32)

    # All branches share one output length because pad = k//2 and k is even.
    lout = L + 2 * PAD_MAX - K_MAX + 1
    for k in KERNELS:
        assert L + 2 * (k // 2) - k + 1 == lout, "branch Lout mismatch (odd kernel size?)"
    lout_pad = ((lout + 8 * S - 1) // (8 * S)) * (8 * S)    # chunks per element multiple of 8
    cs = lout_pad // S                                       # signal chunks per batch element

    bb, g_steps = _tpu_blocking(B, lout_pad)
    b_pad = g_steps * bb
    if b_pad > B:
        x1 = jnp.pad(x1, ((0, b_pad - B), (0, 0)))

    # Raw padded signal only (no HBM im2col): T samples per element.
    T = lout_pad + D - S                                     # = lout_pad + 200
    xp = jnp.pad(x1, ((0, 0), (PAD_MAX, T - PAD_MAX - L)))
    # Matmul LHS: row (b, c) = xp[b, S*c : S*c + D], built from G shifted
    # *static* slices (contiguous copies, no gather): ~26x amplification
    # instead of the previous 200x HBM im2col.
    xp8 = xp.reshape(b_pad, T // S, S)
    lhs = jnp.concatenate([xp8[:, g:g + cs, :] for g in range(G)], axis=-1)
    lhs = lhs.reshape(b_pad * cs, D)                         # (b_pad*cs, 208)

    # Fused (200, 96) weight: branch j's (k, 32) taps sit at rows
    # [PAD_MAX - k//2, PAD_MAX - k//2 + k) of columns [32j, 32j + 32).
    wf = jnp.zeros((K_MAX, 3 * C), jnp.float32)
    for j, (k, w) in enumerate(zip(KERNELS, conv_w)):
        r0 = PAD_MAX - k // 2
        wf = wf.at[r0:r0 + k, j * C:(j + 1) * C].set(
            jnp.transpose(w.reshape(C, k)).astype(jnp.float32))
    # Fold BN running stats: scale goes into the weight, shift stays additive.
    inv_std = [gm / jnp.sqrt(vv + BN_EPS) for gm, vv in zip(bn_gamma, bn_var)]
    scale = jnp.concatenate([s_.astype(jnp.float32) for s_ in inv_std])           # (96,)
    shift = jnp.concatenate([(bt - mu * s_).astype(jnp.float32)
                             for bt, mu, s_ in zip(bn_beta, bn_mean, inv_std)])   # (96,)
    wf = wf * scale[None, :]

    # Block-Toeplitz expansion over the S in-row positions:
    #   w8[d, u*96 + co] = wf[d - u, co]  (0 outside the tap range).
    jidx = jnp.arange(D)[:, None] - jnp.arange(S)[None, :]                # (D, S)
    valid = (jidx >= 0) & (jidx < K_MAX)
    w8 = jnp.where(valid[..., None], wf[jnp.clip(jidx, 0, K_MAX - 1)], 0.0)   # (D, S, 96)
    w8 = w8.reshape(D, N_LANES)
    shift8 = jnp.tile(shift, S).reshape(1, N_LANES)

    # Per-(chunk, in-row position) mean-over-L weights: 1/lout on real output
    # positions, 0 on the lout_pad padding.
    tpos = jnp.arange(cs)[:, None] * S + jnp.arange(S)[None, :]           # (cs, S)
    lmask = jnp.where(tpos < lout, 1.0 / lout, 0.0).astype(jnp.float32)
    lmask = jnp.repeat(lmask, 3 * C, axis=1)                              # (cs, S*96)

    # Sum over the S positions and average the 3 branches: (S*96, C).
    avg = jnp.tile(jnp.eye(C, dtype=jnp.float32), (S * 3, 1)) / 3.0

    se_w1_t = jnp.transpose(se_w1.reshape(C4, C)).astype(jnp.float32)     # (C, C4)
    se_w2_t = jnp.transpose(se_w2.reshape(C, C4)).astype(jnp.float32)     # (C4, C)

    grid_spec = pltpu.PrefetchScalarGridSpec(
        num_scalar_prefetch=0,
        grid=(g_steps,),
        in_specs=[
            pl.BlockSpec((bb * cs, D), lambda i: (i, 0)),        # raw-signal chunk rows
            pl.BlockSpec((D, N_LANES), lambda i: (0, 0)),        # Toeplitz conv weight
            pl.BlockSpec((1, N_LANES), lambda i: (0, 0)),        # BN shift
            pl.BlockSpec((cs, N_LANES), lambda i: (0, 0)),       # mean-over-L weights
            pl.BlockSpec((N_LANES, C), lambda i: (0, 0)),        # position-sum / branch-average
            pl.BlockSpec((C, C4), lambda i: (0, 0)),             # SE 1x1 conv #1
            pl.BlockSpec((C4, C), lambda i: (0, 0)),             # SE 1x1 conv #2
        ],
        out_specs=pl.BlockSpec((1, bb, C), lambda i: (i, 0, 0)),
    )

    out = pl.pallas_call(
        _msblock_kernel,
        out_shape=jax.ShapeDtypeStruct((g_steps, bb, C), jnp.float32),
        grid_spec=grid_spec,
        compiler_params=pltpu.CompilerParams(
            dimension_semantics=("parallel",),
            vmem_limit_bytes=VMEM_LIMIT_BYTES),
    )(lhs, w8, shift8, lmask, avg, se_w1_t, se_w2_t)
    return out.reshape(b_pad, C)[:B]                                      # (B, C)


def _reference(x, conv_w, bn_gamma, bn_beta, bn_mean, bn_var, se_w1, se_w2):
    # Plain-JAX/XLA reference mirroring the PyTorch forward (eval mode).
    def gelu_exact(v):
        return 0.5 * v * (1.0 + jax.scipy.special.erf(v * 0.7071067811865476))

    ys = []
    for k, w, g, b, m, v in zip(KERNELS, conv_w, bn_gamma, bn_beta, bn_mean, bn_var):
        pad = k // 2
        y = lax.conv_general_dilated(x, w, window_strides=(1,),
                                     padding=[(pad, pad)],
                                     dimension_numbers=("NCH", "OIH", "NCH"))
        y = (y - m[None, :, None]) * (g / jnp.sqrt(v + BN_EPS))[None, :, None] + b[None, :, None]
        ys.append(gelu_exact(y))
    y = sum(ys) / len(KERNELS)                               # (B, C, Lout)
    p = jnp.mean(y, axis=-1, keepdims=True)                  # (B, C, 1)
    h = gelu_exact(jnp.einsum("oc,bcl->bol", se_w1.reshape(C4, C), p))
    gate = jax.nn.sigmoid(jnp.einsum("oc,bcl->bol", se_w2.reshape(C, C4), h))
    return jnp.mean(y * gate, axis=-1)                       # (B, C)


if __name__ == "__main__":
    B, L = 2, 127        # Lout = L + 1 = 128 for every (even) kernel size
    key = jax.random.PRNGKey(0)
    ks = jax.random.split(key, 18)

    x = jax.random.normal(ks[0], (B, 1, L), jnp.float32)

    conv_w = tuple(jax.random.normal(ks[1 + i], (C, 1, k), jnp.float32) / jnp.sqrt(k)
                   for i, k in enumerate(KERNELS))
    bn_gamma = tuple(1.0 + 0.1 * jax.random.normal(ks[4 + i], (C,), jnp.float32) for i in range(3))
    bn_beta  = tuple(0.1 * jax.random.normal(ks[7 + i], (C,), jnp.float32) for i in range(3))
    bn_mean  = tuple(0.1 * jax.random.normal(ks[10 + i], (C,), jnp.float32) for i in range(3))
    bn_var   = tuple(0.5 + jax.random.uniform(ks[13 + i], (C,), jnp.float32) for i in range(3))
    se_w1 = jax.random.normal(ks[16], (C4, C, 1), jnp.float32) / jnp.sqrt(C)
    se_w2 = jax.random.normal(ks[17], (C, C4, 1), jnp.float32) / jnp.sqrt(C4)

    fn = jax.jit(multiscale1d_block)
    out = jax.block_until_ready(
        fn(x, conv_w, bn_gamma, bn_beta, bn_mean, bn_var, se_w1, se_w2))
    assert out.shape == (B, C)

    ref = _reference(x, conv_w, bn_gamma, bn_beta, bn_mean, bn_var, se_w1, se_w2)
    err = float(jnp.max(jnp.abs(out - ref)))
    assert bool(jnp.allclose(out, ref, atol=1e-3, rtol=1e-3)), f"max abs err {err}"

    print("KERNEL_OK")
</pallas_src>

<mosaic_0001>
module attributes {stable_mosaic.version = 11 : i64} {
  func.func @_msblock_kernel(%arg0: i32, %arg1: memref<32x208xf32, #tpu.memory_space<vmem>>, %arg2: memref<208x768xf32, #tpu.memory_space<vmem>>, %arg3: memref<1x768xf32, #tpu.memory_space<vmem>>, %arg4: memref<16x768xf32, #tpu.memory_space<vmem>>, %arg5: memref<768x32xf32, #tpu.memory_space<vmem>>, %arg6: memref<32x8xf32, #tpu.memory_space<vmem>>, %arg7: memref<8x32xf32, #tpu.memory_space<vmem>>, %arg8: memref<1x2x32xf32, #tpu.memory_space<vmem>>) attributes {dimension_semantics = [#tpu.dimension_semantics<parallel>], iteration_bounds = array<i64: 1>, scalar_prefetch = 0 : i64, scratch_operands = 0 : i64, tpu.core_type = #tpu.core_type<tc>, window_params = [{transform_indices = @transform_0, window_bounds = array<i64: 32, 208>}, {pipeline_mode = #tpu.pipeline_mode<synchronous>, transform_indices = @transform_1, window_bounds = array<i64: 208, 768>}, {pipeline_mode = #tpu.pipeline_mode<synchronous>, transform_indices = @transform_2, window_bounds = array<i64: 1, 768>}, {pipeline_mode = #tpu.pipeline_mode<synchronous>, transform_indices = @transform_3, window_bounds = array<i64: 16, 768>}, {pipeline_mode = #tpu.pipeline_mode<synchronous>, transform_indices = @transform_4, window_bounds = array<i64: 768, 32>}, {pipeline_mode = #tpu.pipeline_mode<synchronous>, transform_indices = @transform_5, window_bounds = array<i64: 32, 8>}, {pipeline_mode = #tpu.pipeline_mode<synchronous>, transform_indices = @transform_6, window_bounds = array<i64: 8, 32>}, {transform_indices = @transform_7, window_bounds = array<i64: 1, 2, 32>}]} {
    %c0 = arith.constant 0 : index
    %c0_0 = arith.constant 0 : index
    %0 = vector.load %arg1[%c0, %c0_0] : memref<32x208xf32, #tpu.memory_space<vmem>>, vector<32x208xf32>
    %c0_1 = arith.constant 0 : index
    %c0_2 = arith.constant 0 : index
    %1 = vector.load %arg2[%c0_1, %c0_2] : memref<208x768xf32, #tpu.memory_space<vmem>>, vector<208x768xf32>
    %cst = arith.constant dense<0.000000e+00> : vector<32x768xf32>
    %2 = tpu.matmul %0, %1, %cst {dimension_numbers = #tpu.dot_dimension_numbers<[1], [0], [0], [1], [0, 0, 1, 1], [], []>} : vector<32x208xf32>, vector<208x768xf32>, vector<32x768xf32> -> vector<32x768xf32>
    %c0_3 = arith.constant 0 : index
    %c0_4 = arith.constant 0 : index
    %3 = vector.load %arg3[%c0_3, %c0_4] : memref<1x768xf32, #tpu.memory_space<vmem>>, vector<1x768xf32>
    %4 = vector.broadcast %3 : vector<1x768xf32> to vector<32x768xf32>
    %5 = arith.addf %2, %4 : vector<32x768xf32>
    %cst_5 = arith.constant 5.000000e-01 : f32
    %6 = vector.broadcast %cst_5 : f32 to vector<32x768xf32>
    %7 = arith.mulf %6, %5 : vector<32x768xf32>
    %cst_6 = arith.constant 0.707106769 : f32
    %8 = vector.broadcast %cst_6 : f32 to vector<32x768xf32>
    %9 = arith.mulf %5, %8 : vector<32x768xf32>
    %cst_7 = arith.constant -4.000000e+00 : f32
    %cst_8 = arith.constant 4.000000e+00 : f32
    %10 = vector.broadcast %cst_7 : f32 to vector<32x768xf32>
    %11 = arith.maximumf %10, %9 : vector<32x768xf32>
    %12 = vector.broadcast %cst_8 : f32 to vector<32x768xf32>
    %13 = arith.minimumf %12, %11 : vector<32x768xf32>
    %14 = arith.mulf %13, %13 : vector<32x768xf32>
    %cst_9 = arith.constant -2.72614237E-10 : f32
    %15 = vector.broadcast %cst_9 : f32 to vector<32x768xf32>
    %16 = arith.mulf %14, %15 : vector<32x768xf32>
    %cst_10 = arith.constant 2.77068146E-8 : f32
    %17 = vector.broadcast %cst_10 : f32 to vector<32x768xf32>
    %18 = arith.addf %16, %17 : vector<32x768xf32>
    %19 = arith.mulf %18, %14 : vector<32x768xf32>
    %cst_11 = arith.constant -2.10102394E-6 : f32
    %20 = vector.broadcast %cst_11 : f32 to vector<32x768xf32>
    %21 = arith.addf %19, %20 : vector<32x768xf32>
    %22 = arith.mulf %21, %14 : vector<32x768xf32>
    %cst_12 = arith.constant -5.69250624E-5 : f32
    %23 = vector.broadcast %cst_12 : f32 to vector<32x768xf32>
    %24 = arith.addf %22, %23 : vector<32x768xf32>
    %25 = arith.mulf %24, %14 : vector<32x768xf32>
    %cst_13 = arith.constant -7.34990637E-4 : f32
    %26 = vector.broadcast %cst_13 : f32 to vector<32x768xf32>
    %27 = arith.addf %25, %26 : vector<32x768xf32>
    %28 = arith.mulf %27, %14 : vector<32x768xf32>
    %cst_14 = arith.constant -2.954600e-03 : f32
    %29 = vector.broadcast %cst_14 : f32 to vector<32x768xf32>
    %30 = arith.addf %28, %29 : vector<32x768xf32>
    %31 = arith.mulf %30, %14 : vector<32x768xf32>
    %cst_15 = arith.constant -0.0160960332 : f32
    %32 = vector.broadcast %cst_15 : f32 to vector<32x768xf32>
    %33 = arith.addf %31, %32 : vector<32x768xf32>
    %34 = arith.mulf %33, %13 : vector<32x768xf32>
    %cst_16 = arith.constant -1.45660715E-5 : f32
    %35 = vector.broadcast %cst_16 : f32 to vector<32x768xf32>
    %36 = arith.mulf %14, %35 : vector<32x768xf32>
    %cst_17 = arith.constant -2.13374049E-4 : f32
    %37 = vector.broadcast %cst_17 : f32 to vector<32x768xf32>
    %38 = arith.addf %36, %37 : vector<32x768xf32>
    %39 = arith.mulf %38, %14 : vector<32x768xf32>
    %cst_18 = arith.constant -0.00168282702 : f32
    %40 = vector.broadcast %cst_18 : f32 to vector<32x768xf32>
    %41 = arith.addf %39, %40 : vector<32x768xf32>
    %42 = arith.mulf %41, %14 : vector<32x768xf32>
    %cst_19 = arith.constant -0.00737332925 : f32
    %43 = vector.broadcast %cst_19 : f32 to vector<32x768xf32>
    %44 = arith.addf %42, %43 : vector<32x768xf32>
    %45 = arith.mulf %44, %14 : vector<32x768xf32>
    %cst_20 = arith.constant -0.0142647391 : f32
    %46 = vector.broadcast %cst_20 : f32 to vector<32x768xf32>
    %47 = arith.addf %45, %46 : vector<32x768xf32>
    %48 = tpu.reciprocal %47 {approx = true} : vector<32x768xf32> -> vector<32x768xf32>
    %49 = arith.mulf %47, %48 : vector<32x768xf32>
    %cst_21 = arith.constant 2.000000e+00 : f32
    %50 = vector.broadcast %cst_21 : f32 to vector<32x768xf32>
    %51 = arith.subf %50, %49 : vector<32x768xf32>
    %52 = arith.mulf %48, %51 : vector<32x768xf32>
    %53 = arith.mulf %34, %52 : vector<32x768xf32>
    %cst_22 = arith.constant 1.000000e+00 : f32
    %54 = vector.broadcast %cst_22 : f32 to vector<32x768xf32>
    %55 = arith.addf %54, %53 : vector<32x768xf32>
    %56 = arith.mulf %7, %55 : vector<32x768xf32>
    %57 = vector.shape_cast %56 : vector<32x768xf32> to vector<2x16x768xf32>
    %c0_23 = arith.constant 0 : index
    %c0_24 = arith.constant 0 : index
    %58 = vector.load %arg4[%c0_23, %c0_24] : memref<16x768xf32, #tpu.memory_space<vmem>>, vector<16x768xf32>
    %59 = vector.shape_cast %58 : vector<16x768xf32> to vector<1x16x768xf32>
    %60 = vector.broadcast %59 : vector<1x16x768xf32> to vector<2x16x768xf32>
    %61 = arith.mulf %57, %60 : vector<2x16x768xf32>
    %cst_25 = arith.constant dense<0.000000e+00> : vector<2x768xf32>
    %62 = vector.multi_reduction <add>, %61, %cst_25 [1] : vector<2x16x768xf32> to vector<2x768xf32>
    %c0_26 = arith.constant 0 : index
    %c0_27 = arith.constant 0 : index
    %63 = vector.load %arg5[%c0_26, %c0_27] : memref<768x32xf32, #tpu.memory_space<vmem>>, vector<768x32xf32>
    %cst_28 = arith.constant dense<0.000000e+00> : vector<2x32xf32>
    %64 = tpu.matmul %62, %63, %cst_28 {dimension_numbers = #tpu.dot_dimension_numbers<[1], [0], [0], [1], [0, 0, 1, 1], [], []>} : vector<2x768xf32>, vector<768x32xf32>, vector<2x32xf32> -> vector<2x32xf32>
    %c0_29 = arith.constant 0 : index
    %c0_30 = arith.constant 0 : index
    %65 = vector.load %arg6[%c0_29, %c0_30] : memref<32x8xf32, #tpu.memory_space<vmem>>, vector<32x8xf32>
    %cst_31 = arith.constant dense<0.000000e+00> : vector<2x8xf32>
    %66 = tpu.matmul %64, %65, %cst_31 {dimension_numbers = #tpu.dot_dimension_numbers<[1], [0], [0], [1], [0, 0, 1, 1], [], []>} : vector<2x32xf32>, vector<32x8xf32>, vector<2x8xf32> -> vector<2x8xf32>
    %cst_32 = arith.constant 5.000000e-01 : f32
    %67 = vector.broadcast %cst_32 : f32 to vector<2x8xf32>
    %68 = arith.mulf %67, %66 : vector<2x8xf32>
    %cst_33 = arith.constant 0.707106769 : f32
    %69 = vector.broadcast %cst_33 : f32 to vector<2x8xf32>
    %70 = arith.mulf %66, %69 : vector<2x8xf32>
    %cst_34 = arith.constant -4.000000e+00 : f32
    %cst_35 = arith.constant 4.000000e+00 : f32
    %71 = vector.broadcast %cst_34 : f32 to vector<2x8xf32>
    %72 = arith.maximumf %71, %70 : vector<2x8xf32>
    %73 = vector.broadcast %cst_35 : f32 to vector<2x8xf32>
    %74 = arith.minimumf %73, %72 : vector<2x8xf32>
    %75 = arith.mulf %74, %74 : vector<2x8xf32>
    %cst_36 = arith.constant -2.72614237E-10 : f32
    %76 = vector.broadcast %cst_36 : f32 to vector<2x8xf32>
    %77 = arith.mulf %75, %76 : vector<2x8xf32>
    %cst_37 = arith.constant 2.77068146E-8 : f32
    %78 = vector.broadcast %cst_37 : f32 to vector<2x8xf32>
    %79 = arith.addf %77, %78 : vector<2x8xf32>
    %80 = arith.mulf %79, %75 : vector<2x8xf32>
    %cst_38 = arith.constant -2.10102394E-6 : f32
    %81 = vector.broadcast %cst_38 : f32 to vector<2x8xf32>
    %82 = arith.addf %80, %81 : vector<2x8xf32>
    %83 = arith.mulf %82, %75 : vector<2x8xf32>
    %cst_39 = arith.constant -5.69250624E-5 : f32
    %84 = vector.broadcast %cst_39 : f32 to vector<2x8xf32>
    %85 = arith.addf %83, %84 : vector<2x8xf32>
    %86 = arith.mulf %85, %75 : vector<2x8xf32>
    %cst_40 = arith.constant -7.34990637E-4 : f32
    %87 = vector.broadcast %cst_40 : f32 to vector<2x8xf32>
    %88 = arith.addf %86, %87 : vector<2x8xf32>
    %89 = arith.mulf %88, %75 : vector<2x8xf32>
    %cst_41 = arith.constant -2.954600e-03 : f32
    %90 = vector.broadcast %cst_41 : f32 to vector<2x8xf32>
    %91 = arith.addf %89, %90 : vector<2x8xf32>
    %92 = arith.mulf %91, %75 : vector<2x8xf32>
    %cst_42 = arith.constant -0.0160960332 : f32
    %93 = vector.broadcast %cst_42 : f32 to vector<2x8xf32>
    %94 = arith.addf %92, %93 : vector<2x8xf32>
    %95 = arith.mulf %94, %74 : vector<2x8xf32>
    %cst_43 = arith.constant -1.45660715E-5 : f32
    %96 = vector.broadcast %cst_43 : f32 to vector<2x8xf32>
    %97 = arith.mulf %75, %96 : vector<2x8xf32>
    %cst_44 = arith.constant -2.13374049E-4 : f32
    %98 = vector.broadcast %cst_44 : f32 to vector<2x8xf32>
    %99 = arith.addf %97, %98 : vector<2x8xf32>
    %100 = arith.mulf %99, %75 : vector<2x8xf32>
    %cst_45 = arith.constant -0.00168282702 : f32
    %101 = vector.broadcast %cst_45 : f32 to vector<2x8xf32>
    %102 = arith.addf %100, %101 : vector<2x8xf32>
    %103 = arith.mulf %102, %75 : vector<2x8xf32>
    %cst_46 = arith.constant -0.00737332925 : f32
    %104 = vector.broadcast %cst_46 : f32 to vector<2x8xf32>
    %105 = arith.addf %103, %104 : vector<2x8xf32>
    %106 = arith.mulf %105, %75 : vector<2x8xf32>
    %cst_47 = arith.constant -0.0142647391 : f32
    %107 = vector.broadcast %cst_47 : f32 to vector<2x8xf32>
    %108 = arith.addf %106, %107 : vector<2x8xf32>
    %109 = tpu.reciprocal %108 {approx = true} : vector<2x8xf32> -> vector<2x8xf32>
    %110 = arith.mulf %108, %109 : vector<2x8xf32>
    %cst_48 = arith.constant 2.000000e+00 : f32
    %111 = vector.broadcast %cst_48 : f32 to vector<2x8xf32>
    %112 = arith.subf %111, %110 : vector<2x8xf32>
    %113 = arith.mulf %109, %112 : vector<2x8xf32>
    %114 = arith.mulf %95, %113 : vector<2x8xf32>
    %cst_49 = arith.constant 1.000000e+00 : f32
    %115 = vector.broadcast %cst_49 : f32 to vector<2x8xf32>
    %116 = arith.addf %115, %114 : vector<2x8xf32>
    %117 = arith.mulf %68, %116 : vector<2x8xf32>
    %c0_50 = arith.constant 0 : index
    %c0_51 = arith.constant 0 : index
    %118 = vector.load %arg7[%c0_50, %c0_51] : memref<8x32xf32, #tpu.memory_space<vmem>>, vector<8x32xf32>
    %cst_52 = arith.constant dense<0.000000e+00> : vector<2x32xf32>
    %119 = tpu.matmul %117, %118, %cst_52 {dimension_numbers = #tpu.dot_dimension_numbers<[1], [0], [0], [1], [0, 0, 1, 1], [], []>} : vector<2x8xf32>, vector<8x32xf32>, vector<2x32xf32> -> vector<2x32xf32>
    %120 = arith.negf %119 : vector<2x32xf32>
    %121 = math.exp %120 : vector<2x32xf32>
    %cst_53 = arith.constant 1.000000e+00 : f32
    %122 = vector.broadcast %cst_53 : f32 to vector<2x32xf32>
    %123 = arith.addf %122, %121 : vector<2x32xf32>
    %124 = arith.divf %122, %123 : vector<2x32xf32>
    %125 = arith.mulf %64, %124 : vector<2x32xf32>
    %c0_54 = arith.constant 0 : index
    %c0_55 = arith.constant 0 : index
    %c0_56 = arith.constant 0 : index
    %126 = vector.load %arg8[%c0_54, %c0_55, %c0_56] : memref<1x2x32xf32, #tpu.memory_space<vmem>>, vector<1x2x32xf32>
    %127 = vector.shape_cast %126 : vector<1x2x32xf32> to vector<2x32xf32>
    %128 = vector.shape_cast %125 : vector<2x32xf32> to vector<1x2x32xf32>
    tpu.vector_store %arg8[%c0_54, %c0_55, %c0_56], %128 {strides = array<i32>} : memref<1x2x32xf32, #tpu.memory_space<vmem>>, vector<1x2x32xf32>,
    return
  }
  func.func @transform_0(%arg0: i32) -> (i32, i32) {
    %c0_i32 = arith.constant 0 : i32
    %c0_i32_0 = arith.constant 0 : i32
    return %arg0, %c0_i32 : i32, i32
  }
  func.func @transform_1(%arg0: i32) -> (i32, i32) {
    %c0_i32 = arith.constant 0 : i32
    %c0_i32_0 = arith.constant 0 : i32
    %c0_i32_1 = arith.constant 0 : i32
    return %c0_i32, %c0_i32_0 : i32, i32
  }
  func.func @transform_2(%arg0: i32) -> (i32, i32) {
    %c0_i32 = arith.constant 0 : i32
    %c0_i32_0 = arith.constant 0 : i32
    %c0_i32_1 = arith.constant 0 : i32
    return %c0_i32, %c0_i32_0 : i32, i32
  }
  func.func @transform_3(%arg0: i32) -> (i32, i32) {
    %c0_i32 = arith.constant 0 : i32
    %c0_i32_0 = arith.constant 0 : i32
    %c0_i32_1 = arith.constant 0 : i32
    return %c0_i32, %c0_i32_0 : i32, i32
  }
  func.func @transform_4(%arg0: i32) -> (i32, i32) {
    %c0_i32 = arith.constant 0 : i32
    %c0_i32_0 = arith.constant 0 : i32
    %c0_i32_1 = arith.constant 0 : i32
    return %c0_i32, %c0_i32_0 : i32, i32
  }
  func.func @transform_5(%arg0: i32) -> (i32, i32) {
    %c0_i32 = arith.constant 0 : i32
    %c0_i32_0 = arith.constant 0 : i32
    %c0_i32_1 = arith.constant 0 : i32
    return %c0_i32, %c0_i32_0 : i32, i32
  }
  func.func @transform_6(%arg0: i32) -> (i32, i32) {
    %c0_i32 = arith.constant 0 : i32
    %c0_i32_0 = arith.constant 0 : i32
    %c0_i32_1 = arith.constant 0 : i32
    return %c0_i32, %c0_i32_0 : i32, i32
  }
  func.func @transform_7(%arg0: i32) -> (i32, i32, i32) {
    %c0_i32 = arith.constant 0 : i32
    %c0_i32_0 = arith.constant 0 : i32
    %c0_i32_1 = arith.constant 0 : i32
    return %arg0, %c0_i32, %c0_i32_0 : i32, i32, i32
  }
}

</mosaic_0001>

<llo_original>
// kernel: tile.13
$region0: #{tile.13}
  #allocation0 [shape = 's32[1]{0}', space=sflag, size = 0x4, scoped, tag = 'scoped memory for tile.13']
  %s0 = inlined_call_operand.vmem [shape: f32[96], index: 0, kind: input, shape index: {}]
  %s1 = inlined_call_operand.vmem [shape: f32[8,96], index: 1, kind: output, shape index: {}]
  // Predicated region
  $region2: #{tile.13} parent=0 // pred_check
    _
  $region3: #{tile.13} parent=0 // pred_check_branch
    %3 = sbr.rel (0) target = $region5
  $region4: #{tile.13} parent=0 // pred_region
    _
  $region5: #{tile.13} parent=0 // pred_fallthru
    _
  %v4 = vld [vmem:[%s0] ss:$0 sm:$0xff]
  %5 = vst [vmem:[%s1] sm:$0xff] %v4

// kernel: tile.14
$region0: #{tile.14}
  %s0 = inlined_call_operand.vmem [shape: f32[8,96], index: 0, kind: input, shape index: {}]
  %s1 = inlined_call_operand.vmem [shape: f32[1,768], index: 1, kind: output, shape index: {}]
  $region1: #{tile.14} parent=0
    #allocation0 [shape = 'u8[24576]{0}', space=vmem, size = 0x6000, scoped, tag = 'scoped mem for output reshape']
    %s2 = smov 3
    %v3 = vld [vmem:[%s0] ss:$4 sm:%s2]
    %vm4 = vcmask 785408
    %5 = vst.msk [vmem:[#allocation0] ss:$24 sm:$0x3] %vm4, %v3
    %s6 = scalar_lea.vmem %s0, 5
    %s7 = smov 3
    %v8 = vld [vmem:[%s6] ss:$-4 sm:%s7]
    %s9 = scalar_lea.vmem %s0, 1
    %s10 = smov 3
    %v11 = vld [vmem:[%s9] ss:$4 sm:%s10]
    %vm12 = vcmask 261120
    %v13 = vsel %vm12, %v11, %v8
    %14 = vrot.lane.b32.xlu0 %v13, 96
    %v15 = vpop.permute.xlu0 %14
    %vm16 = vcmask 523264
    %s17 = scalar_lea.vmem [#allocation0], 32
    %18 = vst.msk [vmem:[%s17] ss:$-24 sm:$0x3] %vm16, %v15
    %vm19 = vcmask 1048320
    %20 = vst.msk [vmem:[#allocation0] ss:$24 sm:$0x3] %vm19, %v15
    %s21 = scalar_lea.vmem %s0, 6
    %s22 = smov 3
    %v23 = vld [vmem:[%s21] ss:$-4 sm:%s22]
    %s24 = scalar_lea.vmem %s0, 6
    %s25 = smov 3
    %v26 = vld [vmem:[%s24] ss:$-4 sm:%s25]
    %vm27 = vcmask 523264
    %v28 = vsel %vm27, %v26, %v23
    %29 = vrot.lane.b32.xlu0 %v28, 64
    %v30 = vpop.permute.xlu0 %29
    %vm31 = vcmask 261120
    %s32 = scalar_lea.vmem [#allocation0], 40
    %33 = vst.msk [vmem:[%s32] ss:$-24 sm:$0x3] %vm31, %v30
    %vm34 = vcmask 1048064
    %s35 = scalar_lea.vmem [#allocation0], 32
    %36 = vst.msk [vmem:[%s35] ss:$-24 sm:$0x3] %vm34, %v30
    %s37 = scalar_lea.vmem %s0, 7
    %s38 = smov 3
    %v39 = vld [vmem:[%s37] ss:$-4 sm:%s38]
    %40 = vrot.lane.b32.xlu0 %v39, 32
    %v41 = vpop.permute.xlu0 %40
    %vm42 = vcmask 1047808
    %s43 = scalar_lea.vmem [#allocation0], 40
    %44 = vst.msk [vmem:[%s43] ss:$-24 sm:$0x3] %vm42, %v41
    %s46 = sshll.u32 1, 1
    %s47 = ssub.s32 %s46, 1
    %v49 = vld [vmem:[#allocation0] sm:%s47]
    %s50 = sshll.u32 1, 1
    %s51 = ssub.s32 %s50, 1
    %52 = vst [vmem:[%s1] sm:%s51] %v49
    %s53 = scalar_lea.vmem [#allocation0], 8
    %v54 = vld [vmem:[%s53] sm:%s47]
    %s55 = sshll.u32 1, 1
    %s56 = ssub.s32 %s55, 1
    %s57 = scalar_lea.vmem %s1, 1
    %58 = vst [vmem:[%s57] sm:%s56] %v54
    %s59 = scalar_lea.vmem [#allocation0], 16
    %v60 = vld [vmem:[%s59] sm:%s47]
    %s61 = sshll.u32 1, 1
    %s62 = ssub.s32 %s61, 1
    %s63 = smul.addr 1, 2
    %s64 = scalar_lea.vmem %s1, %s63
    %65 = vst [vmem:[%s64] sm:%s62] %v60
    %s66 = scalar_lea.vmem [#allocation0], 24
    %v67 = vld [vmem:[%s66] sm:%s47]
    %s68 = sshll.u32 1, 1
    %s69 = ssub.s32 %s68, 1
    %s70 = smul.addr 1, 3
    %s71 = scalar_lea.vmem %s1, %s70
    %72 = vst [vmem:[%s71] sm:%s69] %v67
    %s73 = scalar_lea.vmem [#allocation0], 32
    %v74 = vld [vmem:[%s73] sm:%s47]
    %s75 = sshll.u32 1, 1
    %s76 = ssub.s32 %s75, 1
    %s77 = smul.addr 1, 4
    %s78 = scalar_lea.vmem %s1, %s77
    %79 = vst [vmem:[%s78] sm:%s76] %v74
    %s80 = scalar_lea.vmem [#allocation0], 40
    %v81 = vld [vmem:[%s80] sm:%s47]
    %s82 = sshll.u32 1, 1
    %s83 = ssub.s32 %s82, 1
    %s84 = smul.addr 1, 5
    %s85 = scalar_lea.vmem %s1, %s84
    %86 = vst [vmem:[%s85] sm:%s83] %v81

// kernel: multiscale1d_block.1
$region0: #{multiscale1d_block.1}
  #allocation0 [shape = 'u32[]', space=smem, size = 0x4, offset = 0x4, fixed_abs, tag = 'smem constant byte address 0x4 - core index']
  #allocation1 [shape = 'u32[144,128]{1,0:T(1,128)}', space=vmem, size = 0x12000, scoped, tag = 'internal scratch']
  %s0 = inlined_call_operand.vmem [shape: f32[32,208], index: 0, kind: input, shape index: {}]
  %s1 = inlined_call_operand.vmem [shape: f32[208,768], index: 1, kind: input, shape index: {}]
  %s2 = inlined_call_operand.vmem [shape: f32[1,768], index: 2, kind: input, shape index: {}]
  %s3 = inlined_call_operand.vmem [shape: f32[16,768], index: 3, kind: input, shape index: {}]
  %s4 = inlined_call_operand.vmem [shape: f32[768,32], index: 4, kind: input, shape index: {}]
  %s5 = inlined_call_operand.vmem [shape: f32[32,8], index: 5, kind: input, shape index: {}]
  %s6 = inlined_call_operand.vmem [shape: f32[8,32], index: 6, kind: input, shape index: {}]
  %s7 = inlined_call_operand.hbm [shape: f32[1,2,32], index: 7, kind: output, shape index: {}]
  %s8 = sld [smem:[#allocation0]]
  $region38: #{multiscale1d_block.1} parent=0
    _
  %s10 = ssub.s32 1, %s8
  %s11 = scalar_select 0, %s10, %s8
  $region1: #{multiscale1d_block.1} parent=0
    #allocation2 [shape = 'u8[1024]{0}', space=vmem, size = 0x400, scoped, tag = 'output window, operand 0, single buffered']
    #allocation3 [shape = 's32[1]{0}', space=sflag, size = 0x4, scoped, tag = 'scoped memory for multiscale1d_block.1']
    %12 = vsyncpa [#allocation3], 0
    // Predicated region
    $region2: #{multiscale1d_block.1} parent=1 // pred_check
      _
    $region3: #{multiscale1d_block.1} parent=1 // pred_check_branch
      %14 = sbr.rel (0) target = $region5
    $region4: #{multiscale1d_block.1} parent=1 // pred_region
      _
    $region5: #{multiscale1d_block.1} parent=1 // pred_fallthru
      _
    // Predicated region
    $region6: #{multiscale1d_block.1} parent=1 // pred_check
      _
    $region7: #{multiscale1d_block.1} parent=1 // pred_check_branch
      %16 = sbr.rel (0) target = $region9
    $region8: #{multiscale1d_block.1} parent=1 // pred_region
      _
    $region9: #{multiscale1d_block.1} parent=1 // pred_fallthru
      _
    // Predicated region
    $region10: #{multiscale1d_block.1} parent=1 // pred_check
      _
    $region11: #{multiscale1d_block.1} parent=1 // pred_check_branch
      %18 = sbr.rel (0) target = $region13
    $region12: #{multiscale1d_block.1} parent=1 // pred_region
      _
    $region13: #{multiscale1d_block.1} parent=1 // pred_fallthru
      _
    // Predicated region
    $region14: #{multiscale1d_block.1} parent=1 // pred_check
      _
    $region15: #{multiscale1d_block.1} parent=1 // pred_check_branch
      %20 = sbr.rel (0) target = $region17
    $region16: #{multiscale1d_block.1} parent=1 // pred_region
      _
    $region17: #{multiscale1d_block.1} parent=1 // pred_fallthru
      _
    // Predicated region
    $region18: #{multiscale1d_block.1} parent=1 // pred_check
      _
    $region19: #{multiscale1d_block.1} parent=1 // pred_check_branch
      %22 = sbr.rel (0) target = $region21
    $region20: #{multiscale1d_block.1} parent=1 // pred_region
      _
    $region21: #{multiscale1d_block.1} parent=1 // pred_fallthru
      _
    // Predicated region
    $region22: #{multiscale1d_block.1} parent=1 // pred_check
      _
    $region23: #{multiscale1d_block.1} parent=1 // pred_check_branch
      %24 = sbr.rel (0) target = $region25
    $region24: #{multiscale1d_block.1} parent=1 // pred_region
      _
    $region25: #{multiscale1d_block.1} parent=1 // pred_fallthru
      _
    // Predicated region
    $region26: #{multiscale1d_block.1} parent=1 // pred_check
      _
    $region27: #{multiscale1d_block.1} parent=1 // pred_check_branch
      %26 = sbr.rel (0) target = $region29
    $region28: #{multiscale1d_block.1} parent=1 // pred_region
      _
    $region29: #{multiscale1d_block.1} parent=1 // pred_fallthru
      _
    %v27 = vld [vmem:[%s0] sm:$0xff]
    %v28 = vld [vmem:[%s0 + $0x8] sm:$0xff]
    %v29 = vld [vmem:[%s0 + $0x10] sm:$0xff]
    %v30 = vld [vmem:[%s0 + $0x18] sm:$0xff]
    %v31 = vld [vmem:[%s0 + $0x20] sm:$0xff]
    %v32 = vld [vmem:[%s0 + $0x28] sm:$0xff]
    %v33 = vld [vmem:[%s0 + $0x30] sm:$0xff]
    %v34 = vld [vmem:[%s0 + $0x38] sm:$0xff]
    %v35 = vld [vmem:[%s1] sm:$0xff]
    %v36 = vld [vmem:[%s1 + $0x8] sm:$0xff]
    %v37 = vld [vmem:[%s1 + $0x10] sm:$0xff]
    %v38 = vld [vmem:[%s1 + $0x18] sm:$0xff]
    %v39 = vld [vmem:[%s1 + $0x20] sm:$0xff]
    %v40 = vld [vmem:[%s1 + $0x28] sm:$0xff]
    %v41 = vld [vmem:[%s1 + $0x30] sm:$0xff]
    %v42 = vld [vmem:[%s1 + $0x38] sm:$0xff]
    %v43 = vld [vmem:[%s1 + $0x40] sm:$0xff]
    %v44 = vld [vmem:[%s1 + $0x48] sm:$0xff]
    %v45 = vld [vmem:[%s1 + $0x50] sm:$0xff]
    %v46 = vld [vmem:[%s1 + $0x58] sm:$0xff]
    %v47 = vld [vmem:[%s1 + $0x60] sm:$0xff]
    %v48 = vld [vmem:[%s1 + $0x68] sm:$0xff]
    %v49 = vld [vmem:[%s1 + $0x70] sm:$0xff]
    %v50 = vld [vmem:[%s1 + $0x78] sm:$0xff]
    %v51 = vld [vmem:[%s1 + $0x80] sm:$0xff]
    %v52 = vld [vmem:[%s1 + $0x88] sm:$0xff]
    %v53 = vld [vmem:[%s1 + $0x90] sm:$0xff]
    %v54 = vld [vmem:[%s1 + $0x98] sm:$0xff]
    %v55 = vld [vmem:[%s1 + $0xa0] sm:$0xff]
    %v56 = vld [vmem:[%s1 + $0xa8] sm:$0xff]
    %v57 = vld [vmem:[%s1 + $0xb0] sm:$0xff]
    %v58 = vld [vmem:[%s1 + $0xb8] sm:$0xff]
    %v59 = vld [vmem:[%s1 + $0xc0] sm:$0xff]
    %v60 = vld [vmem:[%s1 + $0xc8] sm:$0xff]
    %v61 = vld [vmem:[%s1 + $0xd0] sm:$0xff]
    %v62 = vld [vmem:[%s1 + $0xd8] sm:$0xff]
    %v63 = vld [vmem:[%s1 + $0xe0] sm:$0xff]
    %v64 = vld [vmem:[%s1 + $0xe8] sm:$0xff]
    %v65 = vld [vmem:[%s1 + $0xf0] sm:$0xff]
    %v66 = vld [vmem:[%s1 + $0xf8] sm:$0xff]
    %v67 = vld [vmem:[%s1 + $0x100] sm:$0xff]
    %v68 = vld [vmem:[%s1 + $0x108] sm:$0xff]
    %v69 = vld [vmem:[%s1 + $0x110] sm:$0xff]
    %v70 = vld [vmem:[%s1 + $0x118] sm:$0xff]
    %v71 = vld [vmem:[%s1 + $0x120] sm:$0xff]
    %v72 = vld [vmem:[%s1 + $0x128] sm:$0xff]
    %v73 = vld [vmem:[%s1 + $0x130] sm:$0xff]
    %v74 = vld [vmem:[%s1 + $0x138] sm:$0xff]
    %v75 = vld [vmem:[%s1 + $0x140] sm:$0xff]
    %v76 = vld [vmem:[%s1 + $0x148] sm:$0xff]
    %v77 = vld [vmem:[%s1 + $0x150] sm:$0xff]
    %v78 = vld [vmem:[%s1 + $0x158] sm:$0xff]
    %v79 = vld [vmem:[%s1 + $0x160] sm:$0xff]
    %v80 = vld [vmem:[%s1 + $0x168] sm:$0xff]
    %v81 = vld [vmem:[%s1 + $0x170] sm:$0xff]
    %v82 = vld [vmem:[%s1 + $0x178] sm:$0xff]
    %v83 = vld [vmem:[%s1 + $0x180] sm:$0xff]
    %v84 = vld [vmem:[%s1 + $0x188] sm:$0xff]
    %v85 = vld [vmem:[%s1 + $0x190] sm:$0xff]
    %v86 = vld [vmem:[%s1 + $0x198] sm:$0xff]
    %v87 = vld [vmem:[%s1 + $0x1a0] sm:$0xff]
    %v88 = vld [vmem:[%s1 + $0x1a8] sm:$0xff]
    %v89 = vld [vmem:[%s1 + $0x1b0] sm:$0xff]
    %v90 = vld [vmem:[%s1 + $0x1b8] sm:$0xff]
    %v91 = vld [vmem:[%s1 + $0x1c0] sm:$0xff]
    %v92 = vld [vmem:[%s1 + $0x1c8] sm:$0xff]
    %v93 = vld [vmem:[%s1 + $0x1d0] sm:$0xff]
    %v94 = vld [vmem:[%s1 + $0x1d8] sm:$0xff]
    %v95 = vld [vmem:[%s1 + $0x1e0] sm:$0xff]
    %v96 = vld [vmem:[%s1 + $0x1e8] sm:$0xff]
    %v97 = vld [vmem:[%s1 + $0x1f0] sm:$0xff]
    %v98 = vld [vmem:[%s1 + $0x1f8] sm:$0xff]
    %v99 = vld [vmem:[%s1 + $0x200] sm:$0xff]
    %v100 = vld [vmem:[%s1 + $0x208] sm:$0xff]
    %v101 = vld [vmem:[%s1 + $0x210] sm:$0xff]
    %v102 = vld [vmem:[%s1 + $0x218] sm:$0xff]
    %v103 = vld [vmem:[%s1 + $0x220] sm:$0xff]
    %v104 = vld [vmem:[%s1 + $0x228] sm:$0xff]
    %v105 = vld [vmem:[%s1 + $0x230] sm:$0xff]
    %v106 = vld [vmem:[%s1 + $0x238] sm:$0xff]
    %v107 = vld [vmem:[%s1 + $0x240] sm:$0xff]
    %v108 = vld [vmem:[%s1 + $0x248] sm:$0xff]
    %v109 = vld [vmem:[%s1 + $0x250] sm:$0xff]
    %v110 = vld [vmem:[%s1 + $0x258] sm:$0xff]
    %v111 = vld [vmem:[%s1 + $0x260] sm:$0xff]
    %v112 = vld [vmem:[%s1 + $0x268] sm:$0xff]
    %v113 = vld [vmem:[%s1 + $0x270] sm:$0xff]
    %v114 = vld [vmem:[%s1 + $0x278] sm:$0xff]
    %v115 = vld [vmem:[%s1 + $0x280] sm:$0xff]
    %v116 = vld [vmem:[%s1 + $0x288] sm:$0xff]
    %v117 = vld [vmem:[%s1 + $0x290] sm:$0xff]
    %v118 = vld [vmem:[%s1 + $0x298] sm:$0xff]
    %v119 = vld [vmem:[%s1 + $0x2a0] sm:$0xff]
    %v120 = vld [vmem:[%s1 + $0x2a8] sm:$0xff]
    %v121 = vld [vmem:[%s1 + $0x2b0] sm:$0xff]
    %v122 = vld [vmem:[%s1 + $0x2b8] sm:$0xff]
    %v123 = vld [vmem:[%s1 + $0x2c0] sm:$0xff]
    %v124 = vld [vmem:[%s1 + $0x2c8] sm:$0xff]
    %v125 = vld [vmem:[%s1 + $0x2d0] sm:$0xff]
    %v126 = vld [vmem:[%s1 + $0x2d8] sm:$0xff]
    %v127 = vld [vmem:[%s1 + $0x2e0] sm:$0xff]
    %v128 = vld [vmem:[%s1 + $0x2e8] sm:$0xff]
    %v129 = vld [vmem:[%s1 + $0x2f0] sm:$0xff]
    %v130 = vld [vmem:[%s1 + $0x2f8] sm:$0xff]
    %v131 = vld [vmem:[%s1 + $0x300] sm:$0xff]
    %v132 = vld [vmem:[%s1 + $0x308] sm:$0xff]
    %v133 = vld [vmem:[%s1 + $0x310] sm:$0xff]
    %v134 = vld [vmem:[%s1 + $0x318] sm:$0xff]
    %v135 = vld [vmem:[%s1 + $0x320] sm:$0xff]
    %v136 = vld [vmem:[%s1 + $0x328] sm:$0xff]
    %v137 = vld [vmem:[%s1 + $0x330] sm:$0xff]
    %v138 = vld [vmem:[%s1 + $0x338] sm:$0xff]
    %v139 = vld [vmem:[%s1 + $0x340] sm:$0xff]
    %v140 = vld [vmem:[%s1 + $0x348] sm:$0xff]
    %v141 = vld [vmem:[%s1 + $0x350] sm:$0xff]
    %v142 = vld [vmem:[%s1 + $0x358] sm:$0xff]
    %v143 = vld [vmem:[%s1 + $0x360] sm:$0xff]
    %v144 = vld [vmem:[%s1 + $0x368] sm:$0xff]
    %v145 = vld [vmem:[%s1 + $0x370] sm:$0xff]
    %v146 = vld [vmem:[%s1 + $0x378] sm:$0xff]
    %v147 = vld [vmem:[%s1 + $0x380] sm:$0xff]
    %v148 = vld [vmem:[%s1 + $0x388] sm:$0xff]
    %v149 = vld [vmem:[%s1 + $0x390] sm:$0xff]
    %v150 = vld [vmem:[%s1 + $0x398] sm:$0xff]
    %v151 = vld [vmem:[%s1 + $0x3a0] sm:$0xff]
    %v152 = vld [vmem:[%s1 + $0x3a8] sm:$0xff]
    %v153 = vld [vmem:[%s1 + $0x3b0] sm:$0xff]
    %v154 = vld [vmem:[%s1 + $0x3b8] sm:$0xff]
    %v155 = vld [vmem:[%s1 + $0x3c0] sm:$0xff]
    %v156 = vld [vmem:[%s1 + $0x3c8] sm:$0xff]
    %v157 = vld [vmem:[%s1 + $0x3d0] sm:$0xff]
    %v158 = vld [vmem:[%s1 + $0x3d8] sm:$0xff]
    %v159 = vld [vmem:[%s1 + $0x3e0] sm:$0xff]
    %v160 = vld [vmem:[%s1 + $0x3e8] sm:$0xff]
    %v161 = vld [vmem:[%s1 + $0x3f0] sm:$0xff]
    %v162 = vld [vmem:[%s1 + $0x3f8] sm:$0xff]
    %v163 = vld [vmem:[%s1 + $0x400] sm:$0xff]
    %v164 = vld [vmem:[%s1 + $0x408] sm:$0xff]
    %v165 = vld [vmem:[%s1 + $0x410] sm:$0xff]
    %v166 = vld [vmem:[%s1 + $0x418] sm:$0xff]
    %v167 = vld [vmem:[%s1 + $0x420] sm:$0xff]
    %v168 = vld [vmem:[%s1 + $0x428] sm:$0xff]
    %v169 = vld [vmem:[%s1 + $0x430] sm:$0xff]
    %v170 = vld [vmem:[%s1 + $0x438] sm:$0xff]
    %v171 = vld [vmem:[%s1 + $0x440] sm:$0xff]
    %v172 = vld [vmem:[%s1 + $0x448] sm:$0xff]
    %v173 = vld [vmem:[%s1 + $0x450] sm:$0xff]
    %v174 = vld [vmem:[%s1 + $0x458] sm:$0xff]
    %v175 = vld [vmem:[%s1 + $0x460] sm:$0xff]
    %v176 = vld [vmem:[%s1 + $0x468] sm:$0xff]
    %v177 = vld [vmem:[%s1 + $0x470] sm:$0xff]
    %v178 = vld [vmem:[%s1 + $0x478] sm:$0xff]
    %v179 = vld [vmem:[%s1 + $0x480] sm:$0xff]
    %v180 = vld [vmem:[%s1 + $0x488] sm:$0xff]
    %v181 = vld [vmem:[%s1 + $0x490] sm:$0xff]
    %v182 = vld [vmem:[%s1 + $0x498] sm:$0xff]
    %v183 = vld [vmem:[%s1 + $0x4a0] sm:$0xff]
    %v184 = vld [vmem:[%s1 + $0x4a8] sm:$0xff]
    %v185 = vld [vmem:[%s1 + $0x4b0] sm:$0xff]
    %v186 = vld [vmem:[%s1 + $0x4b8] sm:$0xff]
    %v187 = vld [vmem:[%s1 + $0x4c0] sm:$0xff]
    %v188 = vld [vmem:[%s1 + $0x4c8] sm:$0xff]
    %v189 = vld [vmem:[%s1 + $0x4d0] sm:$0xff]
    %v190 = vld [vmem:[%s1 + $0x4d8] sm:$0xff]
    %v191 = vld [vmem:[%s2] sm:$0x3f]
    %v193 = vlaneseq
    %v194 = vshrl.u32 %v193, 7
    %v195 = vsub.s32 0, %v194
    %v196 = vrot.slane %v191, %v195
    %v197 = vlaneseq
    %v198 = vshrl.u32 %v197, 7
    %v199 = vsub.s32 1, %v198
    %v200 = vrot.slane %v191, %v199
    %v201 = vlaneseq
    %v202 = vshrl.u32 %v201, 7
    %v203 = vsub.s32 2, %v202
    %v204 = vrot.slane %v191, %v203
    %v205 = vlaneseq
    %v206 = vshrl.u32 %v205, 7
    %v207 = vsub.s32 3, %v206
    %v208 = vrot.slane %v191, %v207
    %v209 = vlaneseq
    %v210 = vshrl.u32 %v209, 7
    %v211 = vsub.s32 4, %v210
    %v212 = vrot.slane %v191, %v211
    %v213 = vlaneseq
    %v214 = vshrl.u32 %v213, 7
    %v215 = vsub.s32 5, %v214
    %v216 = vrot.slane %v191, %v215
    %vm223 = vcmask 654336
    %v225 = vsel %vm223, %v28, 0
    %v228 = vsel %vm223, %v30, 0
    %v231 = vsel %vm223, %v32, 0
    %v234 = vsel %vm223, %v34, 0
    %236 = vmatprep.subr.mxu0 %v126
    %237 = vmatpush1.msra.mxu0 %v125
    %238 = vmatprep.subr.mxu0 %v120
    %239 = vmatpush1.msra.mxu0 %v119
    %240 = vmatprep.subr.mxu0 %v114
    %241 = vmatpush1.msra.mxu0 %v113
    %242 = vmatprep.subr.mxu0 %v108
    %243 = vmatpush1.msra.mxu0 %v107
    %244 = vmatprep.subr.mxu0 %v102
    %245 = vmatpush1.msra.mxu0 %v101
    %246 = vmatprep.subr.mxu0 %v96
    %247 = vmatpush1.msra.mxu0 %v95
    %248 = vmatprep.subr.mxu0 %v90
    %249 = vmatpush1.msra.mxu0 %v89
    %250 = vmatprep.subr.mxu0 %v84
    %251 = vmatpush1.msra.mxu0 %v83
    %252 = vmatprep.subr.mxu0 %v78
    %253 = vmatpush1.msra.mxu0 %v77
    %254 = vmatprep.subr.mxu0 %v72
    %255 = vmatpush1.msra.mxu0 %v71
    %256 = vmatprep.subr.mxu0 %v66
    %257 = vmatpush1.msra.mxu0 %v65
    %258 = vmatprep.subr.mxu0 %v60
    %259 = vmatpush1.msra.mxu0 %v59
    %260 = vmatprep.subr.mxu0 %v54
    %261 = vmatpush1.msra.mxu0 %v53
    %262 = vmatprep.subr.mxu0 %v48
    %263 = vmatpush1.msra.mxu0 %v47
    %264 = vmatprep.subr.mxu0 %v42
    %265 = vmatpush1.msra.mxu0 %v41
    %266 = vmatprep.subr.mxu0 %v36
    %267 = vmatpush1.msra.mxu0 %v35
    %268 = vmatprep.subr.mxu0 0.0
    %269 = vmatpush2.msra.mxu0 0.0
    %270 = vmatprep.subr.mxu0 0.0
    %271 = vmatpush2.msra.mxu0 0.0
    %272 = vmatprep.subr.mxu0 0.0
    %273 = vmatpush2.msra.mxu0 0.0
    %274 = vmatprep.subr.mxu0 0.0
    %275 = vmatpush2.msra.mxu0 0.0
    %276 = vmatprep.subr.mxu0 0.0
    %277 = vmatpush2.msra.mxu0 0.0
    %278 = vmatprep.subr.mxu0 0.0
    %279 = vmatpush2.msra.mxu0 0.0
    %280 = vmatprep.subr.mxu0 %v186
    %281 = vmatpush2.msra.mxu0 %v185
    %282 = vmatprep.subr.mxu0 %v180
    %283 = vmatpush2.msra.mxu0 %v179
    %284 = vmatprep.subr.mxu0 %v174
    %285 = vmatpush2.msra.mxu0 %v173
    %286 = vmatprep.subr.mxu0 %v168
    %287 = vmatpush2.msra.mxu0 %v167
    %288 = vmatprep.subr.mxu0 %v162
    %289 = vmatpush2.msra.mxu0 %v161
    %290 = vmatprep.subr.mxu0 %v156
    %291 = vmatpush2.msra.mxu0 %v155
    %292 = vmatprep.subr.mxu0 %v150
    %293 = vmatpush2.msra.mxu0 %v149
    %294 = vmatprep.subr.mxu0 %v144
    %295 = vmatpush2.msra.mxu0 %v143
    %296 = vmatprep.subr.mxu0 %v138
    %297 = vmatpush2.msra.mxu0 %v137
    %298 = vmatprep.subr.mxu0 %v132
    %299 = vmatpush2.msra.mxu0 %v131
    %300 = vmatprep.mubr.f32.mxu0 %v225
    %301 = vmatmul.mubr.f32.gmra.mxu0 %v27
    %v302 = vpop.f32.mrf.mxu0
    %v303 = vadd.f32 %v196, %v302
    %v304 = vpop.f32.mrf.mxu0
    %v305 = vadd.f32 %v200, %v304
    %306 = vmatprep.mubr.f32.mxu0 %v228
    %307 = vmatmul.mubr.f32.gmra.mxu0 %v29
    %v308 = vpop.f32.mrf.mxu0
    %v309 = vadd.f32 %v196, %v308
    %v310 = vpop.f32.mrf.mxu0
    %v311 = vadd.f32 %v200, %v310
    %312 = vmatprep.mubr.f32.mxu0 %v231
    %313 = vmatmul.mubr.f32.gmra.mxu0 %v31
    %v314 = vpop.f32.mrf.mxu0
    %v315 = vadd.f32 %v196, %v314
    %v316 = vpop.f32.mrf.mxu0
    %v317 = vadd.f32 %v200, %v316
    %318 = vmatprep.mubr.f32.mxu0 %v234
    %319 = vmatmul.mubr.f32.gmra.mxu0 %v33
    %v320 = vpop.f32.mrf.mxu0
    %v321 = vadd.f32 %v196, %v320
    %v322 = vpop.f32.mrf.mxu0
    %v323 = vadd.f32 %v200, %v322
    %324 = vdwg.mxu0
    %325 = vmatprep.subr.mxu0 %v128
    %326 = vmatpush1.msra.mxu0 %v127
    %327 = vmatprep.subr.mxu0 %v122
    %328 = vmatpush1.msra.mxu0 %v121
    %329 = vmatprep.subr.mxu0 %v116
    %330 = vmatpush1.msra.mxu0 %v115
    %331 = vmatprep.subr.mxu0 %v110
    %332 = vmatpush1.msra.mxu0 %v109
    %333 = vmatprep.subr.mxu0 %v104
    %334 = vmatpush1.msra.mxu0 %v103
    %335 = vmatprep.subr.mxu0 %v98
    %336 = vmatpush1.msra.mxu0 %v97
    %337 = vmatprep.subr.mxu0 %v92
    %338 = vmatpush1.msra.mxu0 %v91
    %339 = vmatprep.subr.mxu0 %v86
    %340 = vmatpush1.msra.mxu0 %v85
    %341 = vmatprep.subr.mxu0 %v80
    %342 = vmatpush1.msra.mxu0 %v79
    %343 = vmatprep.subr.mxu0 %v74
    %344 = vmatpush1.msra.mxu0 %v73
    %345 = vmatprep.subr.mxu0 %v68
    %346 = vmatpush1.msra.mxu0 %v67
    %347 = vmatprep.subr.mxu0 %v62
    %348 = vmatpush1.msra.mxu0 %v61
    %349 = vmatprep.subr.mxu0 %v56
    %350 = vmatpush1.msra.mxu0 %v55
    %351 = vmatprep.subr.mxu0 %v50
    %352 = vmatpush1.msra.mxu0 %v49
    %353 = vmatprep.subr.mxu0 %v44
    %354 = vmatpush1.msra.mxu0 %v43
    %355 = vmatprep.subr.mxu0 %v38
    %356 = vmatpush1.msra.mxu0 %v37
    %357 = vmatprep.subr.mxu0 0.0
    %358 = vmatpush2.msra.mxu0 0.0
    %359 = vmatprep.subr.mxu0 0.0
    %360 = vmatpush2.msra.mxu0 0.0
    %361 = vmatprep.subr.mxu0 0.0
    %362 = vmatpush2.msra.mxu0 0.0
    %363 = vmatprep.subr.mxu0 0.0
    %364 = vmatpush2.msra.mxu0 0.0
    %365 = vmatprep.subr.mxu0 0.0
    %366 = vmatpush2.msra.mxu0 0.0
    %367 = vmatprep.subr.mxu0 0.0
    %368 = vmatpush2.msra.mxu0 0.0
    %369 = vmatprep.subr.mxu0 %v188
    %370 = vmatpush2.msra.mxu0 %v187
    %371 = vmatprep.subr.mxu0 %v182
    %372 = vmatpush2.msra.mxu0 %v181
    %373 = vmatprep.subr.mxu0 %v176
    %374 = vmatpush2.msra.mxu0 %v175
    %375 = vmatprep.subr.mxu0 %v170
    %376 = vmatpush2.msra.mxu0 %v169
    %377 = vmatprep.subr.mxu0 %v164
    %378 = vmatpush2.msra.mxu0 %v163
    %379 = vmatprep.subr.mxu0 %v158
    %380 = vmatpush2.msra.mxu0 %v157
    %381 = vmatprep.subr.mxu0 %v152
    %382 = vmatpush2.msra.mxu0 %v151
    %383 = vmatprep.subr.mxu0 %v146
    %384 = vmatpush2.msra.mxu0 %v145
    %385 = vmatprep.subr.mxu0 %v140
    %386 = vmatpush2.msra.mxu0 %v139
    %387 = vmatprep.subr.mxu0 %v134
    %388 = vmatpush2.msra.mxu0 %v133
    %389 = vmatprep.mubr.f32.mxu0 %v225
    %390 = vmatmul.mubr.f32.gmra.mxu0 %v27
    %v391 = vpop.f32.mrf.mxu0
    %v392 = vadd.f32 %v204, %v391
    %v393 = vpop.f32.mrf.mxu0
    %v394 = vadd.f32 %v208, %v393
    %395 = vmatprep.mubr.f32.mxu0 %v228
    %396 = vmatmul.mubr.f32.gmra.mxu0 %v29
    %v397 = vpop.f32.mrf.mxu0
    %v398 = vadd.f32 %v204, %v397
    %v399 = vpop.f32.mrf.mxu0
    %v400 = vadd.f32 %v208, %v399
    %401 = vmatprep.mubr.f32.mxu0 %v231
    %402 = vmatmul.mubr.f32.gmra.mxu0 %v31
    %v403 = vpop.f32.mrf.mxu0
    %v404 = vadd.f32 %v204, %v403
    %v405 = vpop.f32.mrf.mxu0
    %v406 = vadd.f32 %v208, %v405
    %407 = vmatprep.mubr.f32.mxu0 %v234
    %408 = vmatmul.mubr.f32.gmra.mxu0 %v33
    %v409 = vpop.f32.mrf.mxu0
    %v410 = vadd.f32 %v204, %v409
    %v411 = vpop.f32.mrf.mxu0
    %v412 = vadd.f32 %v208, %v411
    %413 = vdwg.mxu0
    %414 = vmatprep.subr.mxu0 %v130
    %415 = vmatpush1.msra.mxu0 %v129
    %416 = vmatprep.subr.mxu0 %v124
    %417 = vmatpush1.msra.mxu0 %v123
    %418 = vmatprep.subr.mxu0 %v118
    %419 = vmatpush1.msra.mxu0 %v117
    %420 = vmatprep.subr.mxu0 %v112
    %421 = vmatpush1.msra.mxu0 %v111
    %422 = vmatprep.subr.mxu0 %v106
    %423 = vmatpush1.msra.mxu0 %v105
    %424 = vmatprep.subr.mxu0 %v100
    %425 = vmatpush1.msra.mxu0 %v99
    %426 = vmatprep.subr.mxu0 %v94
    %427 = vmatpush1.msra.mxu0 %v93
    %428 = vmatprep.subr.mxu0 %v88
    %429 = vmatpush1.msra.mxu0 %v87
    %430 = vmatprep.subr.mxu0 %v82
    %431 = vmatpush1.msra.mxu0 %v81
    %432 = vmatprep.subr.mxu0 %v76
    %433 = vmatpush1.msra.mxu0 %v75
    %434 = vmatprep.subr.mxu0 %v70
    %435 = vmatpush1.msra.mxu0 %v69
    %436 = vmatprep.subr.mxu0 %v64
    %437 = vmatpush1.msra.mxu0 %v63
    %438 = vmatprep.subr.mxu0 %v58
    %439 = vmatpush1.msra.mxu0 %v57
    %440 = vmatprep.subr.mxu0 %v52
    %441 = vmatpush1.msra.mxu0 %v51
    %442 = vmatprep.subr.mxu0 %v46
    %443 = vmatpush1.msra.mxu0 %v45
    %444 = vmatprep.subr.mxu0 %v40
    %445 = vmatpush1.msra.mxu0 %v39
    %446 = vmatprep.subr.mxu0 0.0
    %447 = vmatpush2.msra.mxu0 0.0
    %448 = vmatprep.subr.mxu0 0.0
    %449 = vmatpush2.msra.mxu0 0.0
    %450 = vmatprep.subr.mxu0 0.0
    %451 = vmatpush2.msra.mxu0 0.0
    %452 = vmatprep.subr.mxu0 0.0
    %453 = vmatpush2.msra.mxu0 0.0
    %454 = vmatprep.subr.mxu0 0.0
    %455 = vmatpush2.msra.mxu0 0.0
    %456 = vmatprep.subr.mxu0 0.0
    %457 = vmatpush2.msra.mxu0 0.0
    %458 = vmatprep.subr.mxu0 %v190
    %459 = vmatpush2.msra.mxu0 %v189
    %460 = vmatprep.subr.mxu0 %v184
    %461 = vmatpush2.msra.mxu0 %v183
    %462 = vmatprep.subr.mxu0 %v178
    %463 = vmatpush2.msra.mxu0 %v177
    %464 = vmatprep.subr.mxu0 %v172
    %465 = vmatpush2.msra.mxu0 %v171
    %466 = vmatprep.subr.mxu0 %v166
    %467 = vmatpush2.msra.mxu0 %v165
    %468 = vmatprep.subr.mxu0 %v160
    %469 = vmatpush2.msra.mxu0 %v159
    %470 = vmatprep.subr.mxu0 %v154
    %471 = vmatpush2.msra.mxu0 %v153
    %472 = vmatprep.subr.mxu0 %v148
    %473 = vmatpush2.msra.mxu0 %v147
    %474 = vmatprep.subr.mxu0 %v142
    %475 = vmatpush2.msra.mxu0 %v141
    %476 = vmatprep.subr.mxu0 %v136
    %477 = vmatpush2.msra.mxu0 %v135
    %478 = vmatprep.mubr.f32.mxu0 %v225
    %479 = vmatmul.mubr.f32.gmra.mxu0 %v27
    %v480 = vpop.f32.mrf.mxu0
    %v481 = vadd.f32 %v212, %v480
    %v482 = vpop.f32.mrf.mxu0
    %v483 = vadd.f32 %v216, %v482
    %484 = vmatprep.mubr.f32.mxu0 %v228
    %485 = vmatmul.mubr.f32.gmra.mxu0 %v29
    %v486 = vpop.f32.mrf.mxu0
    %v487 = vadd.f32 %v212, %v486
    %v488 = vpop.f32.mrf.mxu0
    %v489 = vadd.f32 %v216, %v488
    %490 = vmatprep.mubr.f32.mxu0 %v231
    %491 = vmatmul.mubr.f32.gmra.mxu0 %v31
    %v492 = vpop.f32.mrf.mxu0
    %v493 = vadd.f32 %v212, %v492
    %v494 = vpop.f32.mrf.mxu0
    %v495 = vadd.f32 %v216, %v494
    %496 = vmatprep.mubr.f32.mxu0 %v234
    %497 = vmatmul.mubr.f32.gmra.mxu0 %v33
    %v498 = vpop.f32.mrf.mxu0
    %v499 = vadd.f32 %v212, %v498
    %v500 = vpop.f32.mrf.mxu0
    %v501 = vadd.f32 %v216, %v500
    %502 = vdwg.mxu0
    %v503 = vmul.f32 %v303, 0.5
    %v504 = vmul.f32 %v305, 0.5
    %v505 = vmul.f32 %v392, 0.5
    %v506 = vmul.f32 %v394, 0.5
    %v507 = vmul.f32 %v481, 0.5
    %v508 = vmul.f32 %v483, 0.5
    %v509 = vmul.f32 %v309, 0.5
    %v510 = vmul.f32 %v311, 0.5
    %v511 = vmul.f32 %v398, 0.5
    %v512 = vmul.f32 %v400, 0.5
    %v513 = vmul.f32 %v487, 0.5
    %v514 = vmul.f32 %v489, 0.5
    %v515 = vmul.f32 %v315, 0.5
    %v516 = vmul.f32 %v317, 0.5
    %v517 = vmul.f32 %v404, 0.5
    %v518 = vmul.f32 %v406, 0.5
    %v519 = vmul.f32 %v493, 0.5
    %v520 = vmul.f32 %v495, 0.5
    %v521 = vmul.f32 %v321, 0.5
    %v522 = vmul.f32 %v323, 0.5
    %v523 = vmul.f32 %v410, 0.5
    %v524 = vmul.f32 %v412, 0.5
    %v525 = vmul.f32 %v499, 0.5
    %v526 = vmul.f32 %v501, 0.5
    %v527 = vmul.f32 %v303, 0.70710677
    %v528 = vmul.f32 %v305, 0.70710677
    %v529 = vmul.f32 %v392, 0.70710677
    %v530 = vmul.f32 %v394, 0.70710677
    %v531 = vmul.f32 %v481, 0.70710677
    %v532 = vmul.f32 %v483, 0.70710677
    %v533 = vmul.f32 %v309, 0.70710677
    %v534 = vmul.f32 %v311, 0.70710677
    %v535 = vmul.f32 %v398, 0.70710677
    %v536 = vmul.f32 %v400, 0.70710677
    %v537 = vmul.f32 %v487, 0.70710677
    %v538 = vmul.f32 %v489, 0.70710677
    %v539 = vmul.f32 %v315, 0.70710677
    %v540 = vmul.f32 %v317, 0.70710677
    %v541 = vmul.f32 %v404, 0.70710677
    %v542 = vmul.f32 %v406, 0.70710677
    %v543 = vmul.f32 %v493, 0.70710677
    %v544 = vmul.f32 %v495, 0.70710677
    %v545 = vmul.f32 %v321, 0.70710677
    %v546 = vmul.f32 %v323, 0.70710677
    %v547 = vmul.f32 %v410, 0.70710677
    %v548 = vmul.f32 %v412, 0.70710677
    %v549 = vmul.f32 %v499, 0.70710677
    %v550 = vmul.f32 %v501, 0.70710677
    %v551 = vmax.f32 %v527, -4.0
    %v552 = vmax.f32 %v528, -4.0
    %v553 = vmax.f32 %v529, -4.0
    %v554 = vmax.f32 %v530, -4.0
    %v555 = vmax.f32 %v531, -4.0
    %v556 = vmax.f32 %v532, -4.0
    %v557 = vmax.f32 %v533, -4.0
    %v558 = vmax.f32 %v534, -4.0
    %v559 = vmax.f32 %v535, -4.0
    %v560 = vmax.f32 %v536, -4.0
    %v561 = vmax.f32 %v537, -4.0
    %v562 = vmax.f32 %v538, -4.0
    %v563 = vmax.f32 %v539, -4.0
    %v564 = vmax.f32 %v540, -4.0
    %v565 = vmax.f32 %v541, -4.0
    %v566 = vmax.f32 %v542, -4.0
    %v567 = vmax.f32 %v543, -4.0
    %v568 = vmax.f32 %v544, -4.0
    %v569 = vmax.f32 %v545, -4.0
    %v570 = vmax.f32 %v546, -4.0
    %v571 = vmax.f32 %v547, -4.0
    %v572 = vmax.f32 %v548, -4.0
    %v573 = vmax.f32 %v549, -4.0
    %v574 = vmax.f32 %v550, -4.0
    %v575 = vmin.f32 %v551, 4.0
    %v576 = vmin.f32 %v552, 4.0
    %v577 = vmin.f32 %v553, 4.0
    %v578 = vmin.f32 %v554, 4.0
    %v579 = vmin.f32 %v555, 4.0
    %v580 = vmin.f32 %v556, 4.0
    %v581 = vmin.f32 %v557, 4.0
    %v582 = vmin.f32 %v558, 4.0
    %v583 = vmin.f32 %v559, 4.0
    %v584 = vmin.f32 %v560, 4.0
    %v585 = vmin.f32 %v561, 4.0
    %v586 = vmin.f32 %v562, 4.0
    %v587 = vmin.f32 %v563, 4.0
    %v588 = vmin.f32 %v564, 4.0
    %v589 = vmin.f32 %v565, 4.0
    %v590 = vmin.f32 %v566, 4.0
    %v591 = vmin.f32 %v567, 4.0
    %v592 = vmin.f32 %v568, 4.0
    %v593 = vmin.f32 %v569, 4.0
    %v594 = vmin.f32 %v570, 4.0
    %v595 = vmin.f32 %v571, 4.0
    %v596 = vmin.f32 %v572, 4.0
    %v597 = vmin.f32 %v573, 4.0
    %v598 = vmin.f32 %v574, 4.0
    %v599 = vmul.f32 %v575, %v575
    %v600 = vmul.f32 %v576, %v576
    %v601 = vmul.f32 %v577, %v577
    %v602 = vmul.f32 %v578, %v578
    %v603 = vmul.f32 %v579, %v579
    %v604 = vmul.f32 %v580, %v580
    %v605 = vmul.f32 %v581, %v581
    %v606 = vmul.f32 %v582, %v582
    %v607 = vmul.f32 %v583, %v583
    %v608 = vmul.f32 %v584, %v584
    %v609 = vmul.f32 %v585, %v585
    %v610 = vmul.f32 %v586, %v586
    %v611 = vmul.f32 %v587, %v587
    %v612 = vmul.f32 %v588, %v588
    %v613 = vmul.f32 %v589, %v589
    %v614 = vmul.f32 %v590, %v590
    %v615 = vmul.f32 %v591, %v591
    %v616 = vmul.f32 %v592, %v592
    %v617 = vmul.f32 %v593, %v593
    %v618 = vmul.f32 %v594, %v594
    %v619 = vmul.f32 %v595, %v595
    %v620 = vmul.f32 %v596, %v596
    %v621 = vmul.f32 %v597, %v597
    %v622 = vmul.f32 %v598, %v598
    %v623 = vmul.f32 %v599, -2.7261424e-10
    %v624 = vmul.f32 %v600, -2.7261424e-10
    %v625 = vmul.f32 %v601, -2.7261424e-10
    %v626 = vmul.f32 %v602, -2.7261424e-10
    %v627 = vmul.f32 %v603, -2.7261424e-10
    %v628 = vmul.f32 %v604, -2.7261424e-10
    %v629 = vmul.f32 %v605, -2.7261424e-10
    %v630 = vmul.f32 %v606, -2.7261424e-10
    %v631 = vmul.f32 %v607, -2.7261424e-10
    %v632 = vmul.f32 %v608, -2.7261424e-10
    %v633 = vmul.f32 %v609, -2.7261424e-10
    %v634 = vmul.f32 %v610, -2.7261424e-10
    %v635 = vmul.f32 %v611, -2.7261424e-10
    %v636 = vmul.f32 %v612, -2.7261424e-10
    %v637 = vmul.f32 %v613, -2.7261424e-10
    %v638 = vmul.f32 %v614, -2.7261424e-10
    %v639 = vmul.f32 %v615, -2.7261424e-10
    %v640 = vmul.f32 %v616, -2.7261424e-10
    %v641 = vmul.f32 %v617, -2.7261424e-10
    %v642 = vmul.f32 %v618, -2.7261424e-10
    %v643 = vmul.f32 %v619, -2.7261424e-10
    %v644 = vmul.f32 %v620, -2.7261424e-10
    %v645 = vmul.f32 %v621, -2.7261424e-10
    %v646 = vmul.f32 %v622, -2.7261424e-10
    %v647 = vadd.f32 %v623, 2.7706815e-08
    %v648 = vadd.f32 %v624, 2.7706815e-08
    %v649 = vadd.f32 %v625, 2.7706815e-08
    %v650 = vadd.f32 %v626, 2.7706815e-08
    %v651 = vadd.f32 %v627, 2.7706815e-08
    %v652 = vadd.f32 %v628, 2.7706815e-08
    %v653 = vadd.f32 %v629, 2.7706815e-08
    %v654 = vadd.f32 %v630, 2.7706815e-08
    %v655 = vadd.f32 %v631, 2.7706815e-08
    %v656 = vadd.f32 %v632, 2.7706815e-08
    %v657 = vadd.f32 %v633, 2.7706815e-08
    %v658 = vadd.f32 %v634, 2.7706815e-08
    %v659 = vadd.f32 %v635, 2.7706815e-08
    %v660 = vadd.f32 %v636, 2.7706815e-08
    %v661 = vadd.f32 %v637, 2.7706815e-08
    %v662 = vadd.f32 %v638, 2.7706815e-08
    %v663 = vadd.f32 %v639, 2.7706815e-08
    %v664 = vadd.f32 %v640, 2.7706815e-08
    %v665 = vadd.f32 %v641, 2.7706815e-08
    %v666 = vadd.f32 %v642, 2.7706815e-08
    %v667 = vadd.f32 %v643, 2.7706815e-08
    %v668 = vadd.f32 %v644, 2.7706815e-08
    %v669 = vadd.f32 %v645, 2.7706815e-08
    %v670 = vadd.f32 %v646, 2.7706815e-08
    %v671 = vmul.f32 %v647, %v599
    %v672 = vmul.f32 %v648, %v600
    %v673 = vmul.f32 %v649, %v601
    %v674 = vmul.f32 %v650, %v602
    %v675 = vmul.f32 %v651, %v603
    %v676 = vmul.f32 %v652, %v604
    %v677 = vmul.f32 %v653, %v605
    %v678 = vmul.f32 %v654, %v606
    %v679 = vmul.f32 %v655, %v607
    %v680 = vmul.f32 %v656, %v608
    %v681 = vmul.f32 %v657, %v609
    %v682 = vmul.f32 %v658, %v610
    %v683 = vmul.f32 %v659, %v611
    %v684 = vmul.f32 %v660, %v612
    %v685 = vmul.f32 %v661, %v613
    %v686 = vmul.f32 %v662, %v614
    %v687 = vmul.f32 %v663, %v615
    %v688 = vmul.f32 %v664, %v616
    %v689 = vmul.f32 %v665, %v617
    %v690 = vmul.f32 %v666, %v618
    %v691 = vmul.f32 %v667, %v619
    %v692 = vmul.f32 %v668, %v620
    %v693 = vmul.f32 %v669, %v621
    %v694 = vmul.f32 %v670, %v622
    %v695 = vadd.f32 %v671, -2.101024e-06
    %v696 = vadd.f32 %v672, -2.101024e-06
    %v697 = vadd.f32 %v673, -2.101024e-06
    %v698 = vadd.f32 %v674, -2.101024e-06
    %v699 = vadd.f32 %v675, -2.101024e-06
    %v700 = vadd.f32 %v676, -2.101024e-06
    %v701 = vadd.f32 %v677, -2.101024e-06
    %v702 = vadd.f32 %v678, -2.101024e-06
    %v703 = vadd.f32 %v679, -2.101024e-06
    %v704 = vadd.f32 %v680, -2.101024e-06
    %v705 = vadd.f32 %v681, -2.101024e-06
    %v706 = vadd.f32 %v682, -2.101024e-06
    %v707 = vadd.f32 %v683, -2.101024e-06
    %v708 = vadd.f32 %v684, -2.101024e-06
    %v709 = vadd.f32 %v685, -2.101024e-06
    %v710 = vadd.f32 %v686, -2.101024e-06
    %v711 = vadd.f32 %v687, -2.101024e-06
    %v712 = vadd.f32 %v688, -2.101024e-06
    %v713 = vadd.f32 %v689, -2.101024e-06
    %v714 = vadd.f32 %v690, -2.101024e-06
    %v715 = vadd.f32 %v691, -2.101024e-06
    %v716 = vadd.f32 %v692, -2.101024e-06
    %v717 = vadd.f32 %v693, -2.101024e-06
    %v718 = vadd.f32 %v694, -2.101024e-06
    %v719 = vmul.f32 %v695, %v599
    %v720 = vmul.f32 %v696, %v600
    %v721 = vmul.f32 %v697, %v601
    %v722 = vmul.f32 %v698, %v602
    %v723 = vmul.f32 %v699, %v603
    %v724 = vmul.f32 %v700, %v604
    %v725 = vmul.f32 %v701, %v605
    %v726 = vmul.f32 %v702, %v606
    %v727 = vmul.f32 %v703, %v607
    %v728 = vmul.f32 %v704, %v608
    %v729 = vmul.f32 %v705, %v609
    %v730 = vmul.f32 %v706, %v610
    %v731 = vmul.f32 %v707, %v611
    %v732 = vmul.f32 %v708, %v612
    %v733 = vmul.f32 %v709, %v613
    %v734 = vmul.f32 %v710, %v614
    %v735 = vmul.f32 %v711, %v615
    %v736 = vmul.f32 %v712, %v616
    %v737 = vmul.f32 %v713, %v617
    %v738 = vmul.f32 %v714, %v618
    %v739 = vmul.f32 %v715, %v619
    %v740 = vmul.f32 %v716, %v620
    %v741 = vmul.f32 %v717, %v621
    %v742 = vmul.f32 %v718, %v622
    %v743 = vadd.f32 %v719, -5.6925062e-05
    %v744 = vadd.f32 %v720, -5.6925062e-05
    %v745 = vadd.f32 %v721, -5.6925062e-05
    %v746 = vadd.f32 %v722, -5.6925062e-05
    %v747 = vadd.f32 %v723, -5.6925062e-05
    %v748 = vadd.f32 %v724, -5.6925062e-05
    %v749 = vadd.f32 %v725, -5.6925062e-05
    %v750 = vadd.f32 %v726, -5.6925062e-05
    %v751 = vadd.f32 %v727, -5.6925062e-05
    %v752 = vadd.f32 %v728, -5.6925062e-05
    %v753 = vadd.f32 %v729, -5.6925062e-05
    %v754 = vadd.f32 %v730, -5.6925062e-05
    %v755 = vadd.f32 %v731, -5.6925062e-05
    %v756 = vadd.f32 %v732, -5.6925062e-05
    %v757 = vadd.f32 %v733, -5.6925062e-05
    %v758 = vadd.f32 %v734, -5.6925062e-05
    %v759 = vadd.f32 %v735, -5.6925062e-05
    %v760 = vadd.f32 %v736, -5.6925062e-05
    %v761 = vadd.f32 %v737, -5.6925062e-05
    %v762 = vadd.f32 %v738, -5.6925062e-05
    %v763 = vadd.f32 %v739, -5.6925062e-05
    %v764 = vadd.f32 %v740, -5.6925062e-05
    %v765 = vadd.f32 %v741, -5.6925062e-05
    %v766 = vadd.f32 %v742, -5.6925062e-05
    %v767 = vmul.f32 %v743, %v599
    %v768 = vmul.f32 %v744, %v600
    %v769 = vmul.f32 %v745, %v601
    %v770 = vmul.f32 %v746, %v602
    %v771 = vmul.f32 %v747, %v603
    %v772 = vmul.f32 %v748, %v604
    %v773 = vmul.f32 %v749, %v605
    %v774 = vmul.f32 %v750, %v606
    %v775 = vmul.f32 %v751, %v607
    %v776 = vmul.f32 %v752, %v608
    %v777 = vmul.f32 %v753, %v609
    %v778 = vmul.f32 %v754, %v610
    %v779 = vmul.f32 %v755, %v611
    %v780 = vmul.f32 %v756, %v612
    %v781 = vmul.f32 %v757, %v613
    %v782 = vmul.f32 %v758, %v614
    %v783 = vmul.f32 %v759, %v615
    %v784 = vmul.f32 %v760, %v616
    %v785 = vmul.f32 %v761, %v617
    %v786 = vmul.f32 %v762, %v618
    %v787 = vmul.f32 %v763, %v619
    %v788 = vmul.f32 %v764, %v620
    %v789 = vmul.f32 %v765, %v621
    %v790 = vmul.f32 %v766, %v622
    %v791 = vadd.f32 %v767, -0.00073499064
    %v792 = vadd.f32 %v768, -0.00073499064
    %v793 = vadd.f32 %v769, -0.00073499064
    %v794 = vadd.f32 %v770, -0.00073499064
    %v795 = vadd.f32 %v771, -0.00073499064
    %v796 = vadd.f32 %v772, -0.00073499064
    %v797 = vadd.f32 %v773, -0.00073499064
    %v798 = vadd.f32 %v774, -0.00073499064
    %v799 = vadd.f32 %v775, -0.00073499064
    %v800 = vadd.f32 %v776, -0.00073499064
    %v801 = vadd.f32 %v777, -0.00073499064
    %v802 = vadd.f32 %v778, -0.00073499064
    %v803 = vadd.f32 %v779, -0.00073499064
    %v804 = vadd.f32 %v780, -0.00073499064
    %v805 = vadd.f32 %v781, -0.00073499064
    %v806 = vadd.f32 %v782, -0.00073499064
    %v807 = vadd.f32 %v783, -0.00073499064
    %v808 = vadd.f32 %v784, -0.00073499064
    %v809 = vadd.f32 %v785, -0.00073499064
    %v810 = vadd.f32 %v786, -0.00073499064
    %v811 = vadd.f32 %v787, -0.00073499064
    %v812 = vadd.f32 %v788, -0.00073499064
    %v813 = vadd.f32 %v789, -0.00073499064
    %v814 = vadd.f32 %v790, -0.00073499064
    %v815 = vmul.f32 %v791, %v599
    %v816 = vmul.f32 %v792, %v600
    %v817 = vmul.f32 %v793, %v601
    %v818 = vmul.f32 %v794, %v602
    %v819 = vmul.f32 %v795, %v603
    %v820 = vmul.f32 %v796, %v604
    %v821 = vmul.f32 %v797, %v605
    %v822 = vmul.f32 %v798, %v606
    %v823 = vmul.f32 %v799, %v607
    %v824 = vmul.f32 %v800, %v608
    %v825 = vmul.f32 %v801, %v609
    %v826 = vmul.f32 %v802, %v610
    %v827 = vmul.f32 %v803, %v611
    %v828 = vmul.f32 %v804, %v612
    %v829 = vmul.f32 %v805, %v613
    %v830 = vmul.f32 %v806, %v614
    %v831 = vmul.f32 %v807, %v615
    %v832 = vmul.f32 %v808, %v616
    %v833 = vmul.f32 %v809, %v617
    %v834 = vmul.f32 %v810, %v618
    %v835 = vmul.f32 %v811, %v619
    %v836 = vmul.f32 %v812, %v620
    %v837 = vmul.f32 %v813, %v621
    %v838 = vmul.f32 %v814, %v622
    %v839 = vadd.f32 %v815, -0.0029546
    %v840 = vadd.f32 %v816, -0.0029546
    %v841 = vadd.f32 %v817, -0.0029546
    %v842 = vadd.f32 %v818, -0.0029546
    %v843 = vadd.f32 %v819, -0.0029546
    %v844 = vadd.f32 %v820, -0.0029546
    %v845 = vadd.f32 %v821, -0.0029546
    %v846 = vadd.f32 %v822, -0.0029546
    %v847 = vadd.f32 %v823, -0.0029546
    %v848 = vadd.f32 %v824, -0.0029546
    %v849 = vadd.f32 %v825, -0.0029546
    %v850 = vadd.f32 %v826, -0.0029546
    %v851 = vadd.f32 %v827, -0.0029546
    %v852 = vadd.f32 %v828, -0.0029546
    %v853 = vadd.f32 %v829, -0.0029546
    %v854 = vadd.f32 %v830, -0.0029546
    %v855 = vadd.f32 %v831, -0.0029546
    %v856 = vadd.f32 %v832, -0.0029546
    %v857 = vadd.f32 %v833, -0.0029546
    %v858 = vadd.f32 %v834, -0.0029546
    %v859 = vadd.f32 %v835, -0.0029546
    %v860 = vadd.f32 %v836, -0.0029546
    %v861 = vadd.f32 %v837, -0.0029546
    %v862 = vadd.f32 %v838, -0.0029546
    %v863 = vmul.f32 %v839, %v599
    %v864 = vmul.f32 %v840, %v600
    %v865 = vmul.f32 %v841, %v601
    %v866 = vmul.f32 %v842, %v602
    %v867 = vmul.f32 %v843, %v603
    %v868 = vmul.f32 %v844, %v604
    %v869 = vmul.f32 %v845, %v605
    %v870 = vmul.f32 %v846, %v606
    %v871 = vmul.f32 %v847, %v607
    %v872 = vmul.f32 %v848, %v608
    %v873 = vmul.f32 %v849, %v609
    %v874 = vmul.f32 %v850, %v610
    %v875 = vmul.f32 %v851, %v611
    %v876 = vmul.f32 %v852, %v612
    %v877 = vmul.f32 %v853, %v613
    %v878 = vmul.f32 %v854, %v614
    %v879 = vmul.f32 %v855, %v615
    %v880 = vmul.f32 %v856, %v616
    %v881 = vmul.f32 %v857, %v617
    %v882 = vmul.f32 %v858, %v618
    %v883 = vmul.f32 %v859, %v619
    %v884 = vmul.f32 %v860, %v620
    %v885 = vmul.f32 %v861, %v621
    %v886 = vmul.f32 %v862, %v622
    %v887 = vadd.f32 %v863, -0.016096033
    %v888 = vadd.f32 %v864, -0.016096033
    %v889 = vadd.f32 %v865, -0.016096033
    %v890 = vadd.f32 %v866, -0.016096033
    %v891 = vadd.f32 %v867, -0.016096033
    %v892 = vadd.f32 %v868, -0.016096033
    %v893 = vadd.f32 %v869, -0.016096033
    %v894 = vadd.f32 %v870, -0.016096033
    %v895 = vadd.f32 %v871, -0.016096033
    %v896 = vadd.f32 %v872, -0.016096033
    %v897 = vadd.f32 %v873, -0.016096033
    %v898 = vadd.f32 %v874, -0.016096033
    %v899 = vadd.f32 %v875, -0.016096033
    %v900 = vadd.f32 %v876, -0.016096033
    %v901 = vadd.f32 %v877, -0.016096033
    %v902 = vadd.f32 %v878, -0.016096033
    %v903 = vadd.f32 %v879, -0.016096033
    %v904 = vadd.f32 %v880, -0.016096033
    %v905 = vadd.f32 %v881, -0.016096033
    %v906 = vadd.f32 %v882, -0.016096033
    %v907 = vadd.f32 %v883, -0.016096033
    %v908 = vadd.f32 %v884, -0.016096033
    %v909 = vadd.f32 %v885, -0.016096033
    %v910 = vadd.f32 %v886, -0.016096033
    %v911 = vmul.f32 %v887, %v575
    %v912 = vmul.f32 %v888, %v576
    %v913 = vmul.f32 %v889, %v577
    %v914 = vmul.f32 %v890, %v578
    %v915 = vmul.f32 %v891, %v579
    %v916 = vmul.f32 %v892, %v580
    %v917 = vmul.f32 %v893, %v581
    %v918 = vmul.f32 %v894, %v582
    %v919 = vmul.f32 %v895, %v583
    %v920 = vmul.f32 %v896, %v584
    %v921 = vmul.f32 %v897, %v585
    %v922 = vmul.f32 %v898, %v586
    %v923 = vmul.f32 %v899, %v587
    %v924 = vmul.f32 %v900, %v588
    %v925 = vmul.f32 %v901, %v589
    %v926 = vmul.f32 %v902, %v590
    %v927 = vmul.f32 %v903, %v591
    %v928 = vmul.f32 %v904, %v592
    %v929 = vmul.f32 %v905, %v593
    %v930 = vmul.f32 %v906, %v594
    %v931 = vmul.f32 %v907, %v595
    %v932 = vmul.f32 %v908, %v596
    %v933 = vmul.f32 %v909, %v597
    %v934 = vmul.f32 %v910, %v598
    %v935 = vmul.f32 %v599, -1.45660715e-05
    %v936 = vmul.f32 %v600, -1.45660715e-05
    %v937 = vmul.f32 %v601, -1.45660715e-05
    %v938 = vmul.f32 %v602, -1.45660715e-05
    %v939 = vmul.f32 %v603, -1.45660715e-05
    %v940 = vmul.f32 %v604, -1.45660715e-05
    %v941 = vmul.f32 %v605, -1.45660715e-05
    %v942 = vmul.f32 %v606, -1.45660715e-05
    %v943 = vmul.f32 %v607, -1.45660715e-05
    %v944 = vmul.f32 %v608, -1.45660715e-05
    %v945 = vmul.f32 %v609, -1.45660715e-05
    %v946 = vmul.f32 %v610, -1.45660715e-05
    %v947 = vmul.f32 %v611, -1.45660715e-05
    %v948 = vmul.f32 %v612, -1.45660715e-05
    %v949 = vmul.f32 %v613, -1.45660715e-05
    %v950 = vmul.f32 %v614, -1.45660715e-05
    %v951 = vmul.f32 %v615, -1.45660715e-05
    %v952 = vmul.f32 %v616, -1.45660715e-05
    %v953 = vmul.f32 %v617, -1.45660715e-05
    %v954 = vmul.f32 %v618, -1.45660715e-05
    %v955 = vmul.f32 %v619, -1.45660715e-05
    %v956 = vmul.f32 %v620, -1.45660715e-05
    %v957 = vmul.f32 %v621, -1.45660715e-05
    %v958 = vmul.f32 %v622, -1.45660715e-05
    %v959 = vadd.f32 %v935, -0.00021337405
    %v960 = vadd.f32 %v936, -0.00021337405
    %v961 = vadd.f32 %v937, -0.00021337405
    %v962 = vadd.f32 %v938, -0.00021337405
    %v963 = vadd.f32 %v939, -0.00021337405
    %v964 = vadd.f32 %v940, -0.00021337405
    %v965 = vadd.f32 %v941, -0.00021337405
    %v966 = vadd.f32 %v942, -0.00021337405
    %v967 = vadd.f32 %v943, -0.00021337405
    %v968 = vadd.f32 %v944, -0.00021337405
    %v969 = vadd.f32 %v945, -0.00021337405
    %v970 = vadd.f32 %v946, -0.00021337405
    %v971 = vadd.f32 %v947, -0.00021337405
    %v972 = vadd.f32 %v948, -0.00021337405
    %v973 = vadd.f32 %v949, -0.00021337405
    %v974 = vadd.f32 %v950, -0.00021337405
    %v975 = vadd.f32 %v951, -0.00021337405
    %v976 = vadd.f32 %v952, -0.00021337405
    %v977 = vadd.f32 %v953, -0.00021337405
    %v978 = vadd.f32 %v954, -0.00021337405
    %v979 = vadd.f32 %v955, -0.00021337405
    %v980 = vadd.f32 %v956, -0.00021337405
    %v981 = vadd.f32 %v957, -0.00021337405
    %v982 = vadd.f32 %v958, -0.00021337405
    %v983 = vmul.f32 %v959, %v599
    %v984 = vmul.f32 %v960, %v600
    %v985 = vmul.f32 %v961, %v601
    %v986 = vmul.f32 %v962, %v602
    %v987 = vmul.f32 %v963, %v603
    %v988 = vmul.f32 %v964, %v604
    %v989 = vmul.f32 %v965, %v605
    %v990 = vmul.f32 %v966, %v606
    %v991 = vmul.f32 %v967, %v607
    %v992 = vmul.f32 %v968, %v608
    %v993 = vmul.f32 %v969, %v609
    %v994 = vmul.f32 %v970, %v610
    %v995 = vmul.f32 %v971, %v611
    %v996 = vmul.f32 %v972, %v612
    %v997 = vmul.f32 %v973, %v613
    %v998 = vmul.f32 %v974, %v614
    %v999 = vmul.f32 %v975, %v615
    %v1000 = vmul.f32 %v976, %v616
    %v1001 = vmul.f32 %v977, %v617
    %v1002 = vmul.f32 %v978, %v618
    %v1003 = vmul.f32 %v979, %v619
    %v1004 = vmul.f32 %v980, %v620
    %v1005 = vmul.f32 %v981, %v621
    %v1006 = vmul.f32 %v982, %v622
    %v1007 = vadd.f32 %v983, -0.001682827
    %v1008 = vadd.f32 %v984, -0.001682827
    %v1009 = vadd.f32 %v985, -0.001682827
    %v1010 = vadd.f32 %v986, -0.001682827
    %v1011 = vadd.f32 %v987, -0.001682827
    %v1012 = vadd.f32 %v988, -0.001682827
    %v1013 = vadd.f32 %v989, -0.001682827
    %v1014 = vadd.f32 %v990, -0.001682827
    %v1015 = vadd.f32 %v991, -0.001682827
    %v1016 = vadd.f32 %v992, -0.001682827
    %v1017 = vadd.f32 %v993, -0.001682827
    %v1018 = vadd.f32 %v994, -0.001682827
    %v1019 = vadd.f32 %v995, -0.001682827
    %v1020 = vadd.f32 %v996, -0.001682827
    %v1021 = vadd.f32 %v997, -0.001682827
    %v1022 = vadd.f32 %v998, -0.001682827
    %v1023 = vadd.f32 %v999, -0.001682827
    %v1024 = vadd.f32 %v1000, -0.001682827
    %v1025 = vadd.f32 %v1001, -0.001682827
    %v1026 = vadd.f32 %v1002, -0.001682827
    %v1027 = vadd.f32 %v1003, -0.001682827
    %v1028 = vadd.f32 %v1004, -0.001682827
    %v1029 = vadd.f32 %v1005, -0.001682827
    %v1030 = vadd.f32 %v1006, -0.001682827
    %v1031 = vmul.f32 %v1007, %v599
    %v1032 = vmul.f32 %v1008, %v600
    %v1033 = vmul.f32 %v1009, %v601
    %v1034 = vmul.f32 %v1010, %v602
    %v1035 = vmul.f32 %v1011, %v603
    %v1036 = vmul.f32 %v1012, %v604
    %v1037 = vmul.f32 %v1013, %v605
    %v1038 = vmul.f32 %v1014, %v606
    %v1039 = vmul.f32 %v1015, %v607
    %v1040 = vmul.f32 %v1016, %v608
    %v1041 = vmul.f32 %v1017, %v609
    %v1042 = vmul.f32 %v1018, %v610
    %v1043 = vmul.f32 %v1019, %v611
    %v1044 = vmul.f32 %v1020, %v612
    %v1045 = vmul.f32 %v1021, %v613
    %v1046 = vmul.f32 %v1022, %v614
    %v1047 = vmul.f32 %v1023, %v615
    %v1048 = vmul.f32 %v1024, %v616
    %v1049 = vmul.f32 %v1025, %v617
    %v1050 = vmul.f32 %v1026, %v618
    %v1051 = vmul.f32 %v1027, %v619
    %v1052 = vmul.f32 %v1028, %v620
    %v1053 = vmul.f32 %v1029, %v621
    %v1054 = vmul.f32 %v1030, %v622
    %v1055 = vadd.f32 %v1031, -0.0073733293
    %v1056 = vadd.f32 %v1032, -0.0073733293
    %v1057 = vadd.f32 %v1033, -0.0073733293
    %v1058 = vadd.f32 %v1034, -0.0073733293
    %v1059 = vadd.f32 %v1035, -0.0073733293
    %v1060 = vadd.f32 %v1036, -0.0073733293
    %v1061 = vadd.f32 %v1037, -0.0073733293
    %v1062 = vadd.f32 %v1038, -0.0073733293
    %v1063 = vadd.f32 %v1039, -0.0073733293
    %v1064 = vadd.f32 %v1040, -0.0073733293
    %v1065 = vadd.f32 %v1041, -0.0073733293
    %v1066 = vadd.f32 %v1042, -0.0073733293
    %v1067 = vadd.f32 %v1043, -0.0073733293
    %v1068 = vadd.f32 %v1044, -0.0073733293
    %v1069 = vadd.f32 %v1045, -0.0073733293
    %v1070 = vadd.f32 %v1046, -0.0073733293
    %v1071 = vadd.f32 %v1047, -0.0073733293
    %v1072 = vadd.f32 %v1048, -0.0073733293
    %v1073 = vadd.f32 %v1049, -0.0073733293
    %v1074 = vadd.f32 %v1050, -0.0073733293
    %v1075 = vadd.f32 %v1051, -0.0073733293
    %v1076 = vadd.f32 %v1052, -0.0073733293
    %v1077 = vadd.f32 %v1053, -0.0073733293
    %v1078 = vadd.f32 %v1054, -0.0073733293
    %v1079 = vmul.f32 %v1055, %v599
    %v1080 = vmul.f32 %v1056, %v600
    %v1081 = vmul.f32 %v1057, %v601
    %v1082 = vmul.f32 %v1058, %v602
    %v1083 = vmul.f32 %v1059, %v603
    %v1084 = vmul.f32 %v1060, %v604
    %v1085 = vmul.f32 %v1061, %v605
    %v1086 = vmul.f32 %v1062, %v606
    %v1087 = vmul.f32 %v1063, %v607
    %v1088 = vmul.f32 %v1064, %v608
    %v1089 = vmul.f32 %v1065, %v609
    %v1090 = vmul.f32 %v1066, %v610
    %v1091 = vmul.f32 %v1067, %v611
    %v1092 = vmul.f32 %v1068, %v612
    %v1093 = vmul.f32 %v1069, %v613
    %v1094 = vmul.f32 %v1070, %v614
    %v1095 = vmul.f32 %v1071, %v615
    %v1096 = vmul.f32 %v1072, %v616
    %v1097 = vmul.f32 %v1073, %v617
    %v1098 = vmul.f32 %v1074, %v618
    %v1099 = vmul.f32 %v1075, %v619
    %v1100 = vmul.f32 %v1076, %v620
    %v1101 = vmul.f32 %v1077, %v621
    %v1102 = vmul.f32 %v1078, %v622
    %v1103 = vadd.f32 %v1079, -0.014264739
    %v1104 = vadd.f32 %v1080, -0.014264739
    %v1105 = vadd.f32 %v1081, -0.014264739
    %v1106 = vadd.f32 %v1082, -0.014264739
    %v1107 = vadd.f32 %v1083, -0.014264739
    %v1108 = vadd.f32 %v1084, -0.014264739
    %v1109 = vadd.f32 %v1085, -0.014264739
    %v1110 = vadd.f32 %v1086, -0.014264739
    %v1111 = vadd.f32 %v1087, -0.014264739
    %v1112 = vadd.f32 %v1088, -0.014264739
    %v1113 = vadd.f32 %v1089, -0.014264739
    %v1114 = vadd.f32 %v1090, -0.014264739
    %v1115 = vadd.f32 %v1091, -0.014264739
    %v1116 = vadd.f32 %v1092, -0.014264739
    %v1117 = vadd.f32 %v1093, -0.014264739
    %v1118 = vadd.f32 %v1094, -0.014264739
    %v1119 = vadd.f32 %v1095, -0.014264739
    %v1120 = vadd.f32 %v1096, -0.014264739
    %v1121 = vadd.f32 %v1097, -0.014264739
    %v1122 = vadd.f32 %v1098, -0.014264739
    %v1123 = vadd.f32 %v1099, -0.014264739
    %v1124 = vadd.f32 %v1100, -0.014264739
    %v1125 = vadd.f32 %v1101, -0.014264739
    %v1126 = vadd.f32 %v1102, -0.014264739
    %v1127 = vrcp.pop %v1103
    %v1128 = vrcp.pop %v1104
    %v1129 = vrcp.pop %v1105
    %v1130 = vrcp.pop %v1106
    %v1131 = vrcp.pop %v1107
    %v1132 = vrcp.pop %v1108
    %v1133 = vrcp.pop %v1109
    %v1134 = vrcp.pop %v1110
    %v1135 = vrcp.pop %v1111
    %v1136 = vrcp.pop %v1112
    %v1137 = vrcp.pop %v1113
    %v1138 = vrcp.pop %v1114
    %v1139 = vrcp.pop %v1115
    %v1140 = vrcp.pop %v1116
    %v1141 = vrcp.pop %v1117
    %v1142 = vrcp.pop %v1118
    %v1143 = vrcp.pop %v1119
    %v1144 = vrcp.pop %v1120
    %v1145 = vrcp.pop %v1121
    %v1146 = vrcp.pop %v1122
    %v1147 = vrcp.pop %v1123
    %v1148 = vrcp.pop %v1124
    %v1149 = vrcp.pop %v1125
    %v1150 = vrcp.pop %v1126
    %v1151 = vmul.f32 %v1103, %v1127
    %v1152 = vmul.f32 %v1104, %v1128
    %v1153 = vmul.f32 %v1105, %v1129
    %v1154 = vmul.f32 %v1106, %v1130
    %v1155 = vmul.f32 %v1107, %v1131
    %v1156 = vmul.f32 %v1108, %v1132
    %v1157 = vmul.f32 %v1109, %v1133
    %v1158 = vmul.f32 %v1110, %v1134
    %v1159 = vmul.f32 %v1111, %v1135
    %v1160 = vmul.f32 %v1112, %v1136
    %v1161 = vmul.f32 %v1113, %v1137
    %v1162 = vmul.f32 %v1114, %v1138
    %v1163 = vmul.f32 %v1115, %v1139
    %v1164 = vmul.f32 %v1116, %v1140
    %v1165 = vmul.f32 %v1117, %v1141
    %v1166 = vmul.f32 %v1118, %v1142
    %v1167 = vmul.f32 %v1119, %v1143
    %v1168 = vmul.f32 %v1120, %v1144
    %v1169 = vmul.f32 %v1121, %v1145
    %v1170 = vmul.f32 %v1122, %v1146
    %v1171 = vmul.f32 %v1123, %v1147
    %v1172 = vmul.f32 %v1124, %v1148
    %v1173 = vmul.f32 %v1125, %v1149
    %v1174 = vmul.f32 %v1126, %v1150
    %v1175 = vsub.f32 2.0, %v1151
    %v1176 = vsub.f32 2.0, %v1152
    %v1177 = vsub.f32 2.0, %v1153
    %v1178 = vsub.f32 2.0, %v1154
    %v1179 = vsub.f32 2.0, %v1155
    %v1180 = vsub.f32 2.0, %v1156
    %v1181 = vsub.f32 2.0, %v1157
    %v1182 = vsub.f32 2.0, %v1158
    %v1183 = vsub.f32 2.0, %v1159
    %v1184 = vsub.f32 2.0, %v1160
    %v1185 = vsub.f32 2.0, %v1161
    %v1186 = vsub.f32 2.0, %v1162
    %v1187 = vsub.f32 2.0, %v1163
    %v1188 = vsub.f32 2.0, %v1164
    %v1189 = vsub.f32 2.0, %v1165
    %v1190 = vsub.f32 2.0, %v1166
    %v1191 = vsub.f32 2.0, %v1167
    %v1192 = vsub.f32 2.0, %v1168
    %v1193 = vsub.f32 2.0, %v1169
    %v1194 = vsub.f32 2.0, %v1170
    %v1195 = vsub.f32 2.0, %v1171
    %v1196 = vsub.f32 2.0, %v1172
    %v1197 = vsub.f32 2.0, %v1173
    %v1198 = vsub.f32 2.0, %v1174
    %v1199 = vmul.f32 %v1127, %v1175
    %v1200 = vmul.f32 %v1128, %v1176
    %v1201 = vmul.f32 %v1129, %v1177
    %v1202 = vmul.f32 %v1130, %v1178
    %v1203 = vmul.f32 %v1131, %v1179
    %v1204 = vmul.f32 %v1132, %v1180
    %v1205 = vmul.f32 %v1133, %v1181
    %v1206 = vmul.f32 %v1134, %v1182
    %v1207 = vmul.f32 %v1135, %v1183
    %v1208 = vmul.f32 %v1136, %v1184
    %v1209 = vmul.f32 %v1137, %v1185
    %v1210 = vmul.f32 %v1138, %v1186
    %v1211 = vmul.f32 %v1139, %v1187
    %v1212 = vmul.f32 %v1140, %v1188
    %v1213 = vmul.f32 %v1141, %v1189
    %v1214 = vmul.f32 %v1142, %v1190
    %v1215 = vmul.f32 %v1143, %v1191
    %v1216 = vmul.f32 %v1144, %v1192
    %v1217 = vmul.f32 %v1145, %v1193
    %v1218 = vmul.f32 %v1146, %v1194
    %v1219 = vmul.f32 %v1147, %v1195
    %v1220 = vmul.f32 %v1148, %v1196
    %v1221 = vmul.f32 %v1149, %v1197
    %v1222 = vmul.f32 %v1150, %v1198
    %v1223 = vmul.f32 %v911, %v1199
    %v1224 = vmul.f32 %v912, %v1200
    %v1225 = vmul.f32 %v913, %v1201
    %v1226 = vmul.f32 %v914, %v1202
    %v1227 = vmul.f32 %v915, %v1203
    %v1228 = vmul.f32 %v916, %v1204
    %v1229 = vmul.f32 %v917, %v1205
    %v1230 = vmul.f32 %v918, %v1206
    %v1231 = vmul.f32 %v919, %v1207
    %v1232 = vmul.f32 %v920, %v1208
    %v1233 = vmul.f32 %v921, %v1209
    %v1234 = vmul.f32 %v922, %v1210
    %v1235 = vmul.f32 %v923, %v1211
    %v1236 = vmul.f32 %v924, %v1212
    %v1237 = vmul.f32 %v925, %v1213
    %v1238 = vmul.f32 %v926, %v1214
    %v1239 = vmul.f32 %v927, %v1215
    %v1240 = vmul.f32 %v928, %v1216
    %v1241 = vmul.f32 %v929, %v1217
    %v1242 = vmul.f32 %v930, %v1218
    %v1243 = vmul.f32 %v931, %v1219
    %v1244 = vmul.f32 %v932, %v1220
    %v1245 = vmul.f32 %v933, %v1221
    %v1246 = vmul.f32 %v934, %v1222
    %v1247 = vadd.f32 %v1223, 1.0
    %v1248 = vadd.f32 %v1224, 1.0
    %v1249 = vadd.f32 %v1225, 1.0
    %v1250 = vadd.f32 %v1226, 1.0
    %v1251 = vadd.f32 %v1227, 1.0
    %v1252 = vadd.f32 %v1228, 1.0
    %v1253 = vadd.f32 %v1229, 1.0
    %v1254 = vadd.f32 %v1230, 1.0
    %v1255 = vadd.f32 %v1231, 1.0
    %v1256 = vadd.f32 %v1232, 1.0
    %v1257 = vadd.f32 %v1233, 1.0
    %v1258 = vadd.f32 %v1234, 1.0
    %v1259 = vadd.f32 %v1235, 1.0
    %v1260 = vadd.f32 %v1236, 1.0
    %v1261 = vadd.f32 %v1237, 1.0
    %v1262 = vadd.f32 %v1238, 1.0
    %v1263 = vadd.f32 %v1239, 1.0
    %v1264 = vadd.f32 %v1240, 1.0
    %v1265 = vadd.f32 %v1241, 1.0
    %v1266 = vadd.f32 %v1242, 1.0
    %v1267 = vadd.f32 %v1243, 1.0
    %v1268 = vadd.f32 %v1244, 1.0
    %v1269 = vadd.f32 %v1245, 1.0
    %v1270 = vadd.f32 %v1246, 1.0
    %v1271 = vmul.f32 %v503, %v1247
    %v1272 = vmul.f32 %v504, %v1248
    %v1273 = vmul.f32 %v505, %v1249
    %v1274 = vmul.f32 %v506, %v1250
    %v1275 = vmul.f32 %v507, %v1251
    %v1276 = vmul.f32 %v508, %v1252
    %v1277 = vmul.f32 %v509, %v1253
    %v1278 = vmul.f32 %v510, %v1254
    %v1279 = vmul.f32 %v511, %v1255
    %v1280 = vmul.f32 %v512, %v1256
    %v1281 = vmul.f32 %v513, %v1257
    %v1282 = vmul.f32 %v514, %v1258
    %v1283 = vmul.f32 %v515, %v1259
    %v1284 = vmul.f32 %v516, %v1260
    %v1285 = vmul.f32 %v517, %v1261
    %v1286 = vmul.f32 %v518, %v1262
    %v1287 = vmul.f32 %v519, %v1263
    %v1288 = vmul.f32 %v520, %v1264
    %v1289 = vmul.f32 %v521, %v1265
    %v1290 = vmul.f32 %v522, %v1266
    %v1291 = vmul.f32 %v523, %v1267
    %v1292 = vmul.f32 %v524, %v1268
    %v1293 = vmul.f32 %v525, %v1269
    %v1294 = vmul.f32 %v526, %v1270
    %v1295 = vld [vmem:[%s3] sm:$0xff]
    %v1296 = vld [vmem:[%s3 + $0x8] sm:$0xff]
    %v1297 = vld [vmem:[%s3 + $0x10] sm:$0xff]
    %v1298 = vld [vmem:[%s3 + $0x18] sm:$0xff]
    %v1299 = vld [vmem:[%s3 + $0x20] sm:$0xff]
    %v1300 = vld [vmem:[%s3 + $0x28] sm:$0xff]
    %v1301 = vld [vmem:[%s3 + $0x30] sm:$0xff]
    %v1302 = vld [vmem:[%s3 + $0x38] sm:$0xff]
    %v1303 = vld [vmem:[%s3 + $0x40] sm:$0xff]
    %v1304 = vld [vmem:[%s3 + $0x48] sm:$0xff]
    %v1305 = vld [vmem:[%s3 + $0x50] sm:$0xff]
    %v1306 = vld [vmem:[%s3 + $0x58] sm:$0xff]
    %v1307 = vmul.f32 %v1271, %v1295
    %v1308 = vmul.f32 %v1272, %v1296
    %v1309 = vmul.f32 %v1273, %v1297
    %v1310 = vmul.f32 %v1274, %v1298
    %v1311 = vmul.f32 %v1275, %v1299
    %v1312 = vmul.f32 %v1276, %v1300
    %v1313 = vmul.f32 %v1277, %v1301
    %v1314 = vmul.f32 %v1278, %v1302
    %v1315 = vmul.f32 %v1279, %v1303
    %v1316 = vmul.f32 %v1280, %v1304
    %v1317 = vmul.f32 %v1281, %v1305
    %v1318 = vmul.f32 %v1282, %v1306
    %v1319 = vmul.f32 %v1283, %v1295
    %v1320 = vmul.f32 %v1284, %v1296
    %v1321 = vmul.f32 %v1285, %v1297
    %v1322 = vmul.f32 %v1286, %v1298
    %v1323 = vmul.f32 %v1287, %v1299
    %v1324 = vmul.f32 %v1288, %v1300
    %v1325 = vmul.f32 %v1289, %v1301
    %v1326 = vmul.f32 %v1290, %v1302
    %v1327 = vmul.f32 %v1291, %v1303
    %v1328 = vmul.f32 %v1292, %v1304
    %v1329 = vmul.f32 %v1293, %v1305
    %v1330 = vmul.f32 %v1294, %v1306
    %v1331 = vadd.f32 %v1307, %v1313
    %v1332 = vrot.slane %v1331, 4
    %v1333 = vadd.f32 %v1331, %v1332
    %v1334 = vrot.slane %v1333, 2
    %v1335 = vadd.f32 %v1333, %v1334
    %v1336 = vrot.slane %v1335, 1
    %v1337 = vadd.f32 %v1335, %v1336
    %v1338 = vadd.f32 %v1308, %v1314
    %v1339 = vrot.slane %v1338, 4
    %v1340 = vadd.f32 %v1338, %v1339
    %v1341 = vrot.slane %v1340, 2
    %v1342 = vadd.f32 %v1340, %v1341
    %v1343 = vrot.slane %v1342, 1
    %v1344 = vadd.f32 %v1342, %v1343
    %v1345 = vadd.f32 %v1309, %v1315
    %v1346 = vrot.slane %v1345, 4
    %v1347 = vadd.f32 %v1345, %v1346
    %v1348 = vrot.slane %v1347, 2
    %v1349 = vadd.f32 %v1347, %v1348
    %v1350 = vrot.slane %v1349, 1
    %v1351 = vadd.f32 %v1349, %v1350
    %v1352 = vadd.f32 %v1310, %v1316
    %v1353 = vrot.slane %v1352, 4
    %v1354 = vadd.f32 %v1352, %v1353
    %v1355 = vrot.slane %v1354, 2
    %v1356 = vadd.f32 %v1354, %v1355
    %v1357 = vrot.slane %v1356, 1
    %v1358 = vadd.f32 %v1356, %v1357
    %v1359 = vadd.f32 %v1311, %v1317
    %v1360 = vrot.slane %v1359, 4
    %v1361 = vadd.f32 %v1359, %v1360
    %v1362 = vrot.slane %v1361, 2
    %v1363 = vadd.f32 %v1361, %v1362
    %v1364 = vrot.slane %v1363, 1
    %v1365 = vadd.f32 %v1363, %v1364
    %v1366 = vadd.f32 %v1312, %v1318
    %v1367 = vrot.slane %v1366, 4
    %v1368 = vadd.f32 %v1366, %v1367
    %v1369 = vrot.slane %v1368, 2
    %v1370 = vadd.f32 %v1368, %v1369
    %v1371 = vrot.slane %v1370, 1
    %v1372 = vadd.f32 %v1370, %v1371
    %v1373 = vadd.f32 %v1319, %v1325
    %v1374 = vrot.slane %v1373, 4
    %v1375 = vadd.f32 %v1373, %v1374
    %v1376 = vrot.slane %v1375, 2
    %v1377 = vadd.f32 %v1375, %v1376
    %v1378 = vrot.slane %v1377, 1
    %v1379 = vadd.f32 %v1377, %v1378
    %v1380 = vadd.f32 %v1320, %v1326
    %v1381 = vrot.slane %v1380, 4
    %v1382 = vadd.f32 %v1380, %v1381
    %v1383 = vrot.slane %v1382, 2
    %v1384 = vadd.f32 %v1382, %v1383
    %v1385 = vrot.slane %v1384, 1
    %v1386 = vadd.f32 %v1384, %v1385
    %v1387 = vadd.f32 %v1321, %v1327
    %v1388 = vrot.slane %v1387, 4
    %v1389 = vadd.f32 %v1387, %v1388
    %v1390 = vrot.slane %v1389, 2
    %v1391 = vadd.f32 %v1389, %v1390
    %v1392 = vrot.slane %v1391, 1
    %v1393 = vadd.f32 %v1391, %v1392
    %v1394 = vadd.f32 %v1322, %v1328
    %v1395 = vrot.slane %v1394, 4
    %v1396 = vadd.f32 %v1394, %v1395
    %v1397 = vrot.slane %v1396, 2
    %v1398 = vadd.f32 %v1396, %v1397
    %v1399 = vrot.slane %v1398, 1
    %v1400 = vadd.f32 %v1398, %v1399
    %v1401 = vadd.f32 %v1323, %v1329
    %v1402 = vrot.slane %v1401, 4
    %v1403 = vadd.f32 %v1401, %v1402
    %v1404 = vrot.slane %v1403, 2
    %v1405 = vadd.f32 %v1403, %v1404
    %v1406 = vrot.slane %v1405, 1
    %v1407 = vadd.f32 %v1405, %v1406
    %v1408 = vadd.f32 %v1324, %v1330
    %v1409 = vrot.slane %v1408, 4
    %v1410 = vadd.f32 %v1408, %v1409
    %v1411 = vrot.slane %v1410, 2
    %v1412 = vadd.f32 %v1410, %v1411
    %v1413 = vrot.slane %v1412, 1
    %v1414 = vadd.f32 %v1412, %v1413
    %v1415 = vld [vmem:[%s4] sm:$0xff]
    %v1416 = vld [vmem:[%s4 + $0x8] sm:$0xff]
    %v1417 = vld [vmem:[%s4 + $0x10] sm:$0xff]
    %v1418 = vld [vmem:[%s4 + $0x18] sm:$0xff]
    %v1419 = vld [vmem:[%s4 + $0x20] sm:$0xff]
    %v1420 = vld [vmem:[%s4 + $0x28] sm:$0xff]
    %v1421 = vld [vmem:[%s4 + $0x30] sm:$0xff]
    %v1422 = vld [vmem:[%s4 + $0x38] sm:$0xff]
    %v1423 = vld [vmem:[%s4 + $0x40] sm:$0xff]
    %v1424 = vld [vmem:[%s4 + $0x48] sm:$0xff]
    %v1425 = vld [vmem:[%s4 + $0x50] sm:$0xff]
    %v1426 = vld [vmem:[%s4 + $0x58] sm:$0xff]
    %v1427 = vld [vmem:[%s4 + $0x60] sm:$0xff]
    %v1428 = vld [vmem:[%s4 + $0x68] sm:$0xff]
    %v1429 = vld [vmem:[%s4 + $0x70] sm:$0xff]
    %v1430 = vld [vmem:[%s4 + $0x78] sm:$0xff]
    %v1431 = vld [vmem:[%s4 + $0x80] sm:$0xff]
    %v1432 = vld [vmem:[%s4 + $0x88] sm:$0xff]
    %v1433 = vld [vmem:[%s4 + $0x90] sm:$0xff]
    %v1434 = vld [vmem:[%s4 + $0x98] sm:$0xff]
    %v1435 = vld [vmem:[%s4 + $0xa0] sm:$0xff]
    %v1436 = vld [vmem:[%s4 + $0xa8] sm:$0xff]
    %v1437 = vld [vmem:[%s4 + $0xb0] sm:$0xff]
    %v1438 = vld [vmem:[%s4 + $0xb8] sm:$0xff]
    %v1439 = vld [vmem:[%s4 + $0xc0] sm:$0xff]
    %v1440 = vld [vmem:[%s4 + $0xc8] sm:$0xff]
    %v1441 = vld [vmem:[%s4 + $0xd0] sm:$0xff]
    %v1442 = vld [vmem:[%s4 + $0xd8] sm:$0xff]
    %v1443 = vld [vmem:[%s4 + $0xe0] sm:$0xff]
    %v1444 = vld [vmem:[%s4 + $0xe8] sm:$0xff]
    %v1445 = vld [vmem:[%s4 + $0xf0] sm:$0xff]
    %v1446 = vld [vmem:[%s4 + $0xf8] sm:$0xff]
    %v1447 = vld [vmem:[%s4 + $0x100] sm:$0xff]
    %v1448 = vld [vmem:[%s4 + $0x108] sm:$0xff]
    %v1449 = vld [vmem:[%s4 + $0x110] sm:$0xff]
    %v1450 = vld [vmem:[%s4 + $0x118] sm:$0xff]
    %v1451 = vld [vmem:[%s4 + $0x120] sm:$0xff]
    %v1452 = vld [vmem:[%s4 + $0x128] sm:$0xff]
    %v1453 = vld [vmem:[%s4 + $0x130] sm:$0xff]
    %v1454 = vld [vmem:[%s4 + $0x138] sm:$0xff]
    %v1455 = vld [vmem:[%s4 + $0x140] sm:$0xff]
    %v1456 = vld [vmem:[%s4 + $0x148] sm:$0xff]
    %v1457 = vld [vmem:[%s4 + $0x150] sm:$0xff]
    %v1458 = vld [vmem:[%s4 + $0x158] sm:$0xff]
    %v1459 = vld [vmem:[%s4 + $0x160] sm:$0xff]
    %v1460 = vld [vmem:[%s4 + $0x168] sm:$0xff]
    %v1461 = vld [vmem:[%s4 + $0x170] sm:$0xff]
    %v1462 = vld [vmem:[%s4 + $0x178] sm:$0xff]
    %v1463 = vld [vmem:[%s4 + $0x180] sm:$0xff]
    %v1464 = vld [vmem:[%s4 + $0x188] sm:$0xff]
    %v1465 = vld [vmem:[%s4 + $0x190] sm:$0xff]
    %v1466 = vld [vmem:[%s4 + $0x198] sm:$0xff]
    %v1467 = vld [vmem:[%s4 + $0x1a0] sm:$0xff]
    %v1468 = vld [vmem:[%s4 + $0x1a8] sm:$0xff]
    %v1469 = vld [vmem:[%s4 + $0x1b0] sm:$0xff]
    %v1470 = vld [vmem:[%s4 + $0x1b8] sm:$0xff]
    %v1471 = vld [vmem:[%s4 + $0x1c0] sm:$0xff]
    %v1472 = vld [vmem:[%s4 + $0x1c8] sm:$0xff]
    %v1473 = vld [vmem:[%s4 + $0x1d0] sm:$0xff]
    %v1474 = vld [vmem:[%s4 + $0x1d8] sm:$0xff]
    %v1475 = vld [vmem:[%s4 + $0x1e0] sm:$0xff]
    %v1476 = vld [vmem:[%s4 + $0x1e8] sm:$0xff]
    %v1477 = vld [vmem:[%s4 + $0x1f0] sm:$0xff]
    %v1478 = vld [vmem:[%s4 + $0x1f8] sm:$0xff]
    %v1479 = vld [vmem:[%s4 + $0x200] sm:$0xff]
    %v1480 = vld [vmem:[%s4 + $0x208] sm:$0xff]
    %v1481 = vld [vmem:[%s4 + $0x210] sm:$0xff]
    %v1482 = vld [vmem:[%s4 + $0x218] sm:$0xff]
    %v1483 = vld [vmem:[%s4 + $0x220] sm:$0xff]
    %v1484 = vld [vmem:[%s4 + $0x228] sm:$0xff]
    %v1485 = vld [vmem:[%s4 + $0x230] sm:$0xff]
    %v1486 = vld [vmem:[%s4 + $0x238] sm:$0xff]
    %v1487 = vld [vmem:[%s4 + $0x240] sm:$0xff]
    %v1488 = vld [vmem:[%s4 + $0x248] sm:$0xff]
    %v1489 = vld [vmem:[%s4 + $0x250] sm:$0xff]
    %v1490 = vld [vmem:[%s4 + $0x258] sm:$0xff]
    %v1491 = vld [vmem:[%s4 + $0x260] sm:$0xff]
    %v1492 = vld [vmem:[%s4 + $0x268] sm:$0xff]
    %v1493 = vld [vmem:[%s4 + $0x270] sm:$0xff]
    %v1494 = vld [vmem:[%s4 + $0x278] sm:$0xff]
    %v1495 = vld [vmem:[%s4 + $0x280] sm:$0xff]
    %v1496 = vld [vmem:[%s4 + $0x288] sm:$0xff]
    %v1497 = vld [vmem:[%s4 + $0x290] sm:$0xff]
    %v1498 = vld [vmem:[%s4 + $0x298] sm:$0xff]
    %v1499 = vld [vmem:[%s4 + $0x2a0] sm:$0xff]
    %v1500 = vld [vmem:[%s4 + $0x2a8] sm:$0xff]
    %v1501 = vld [vmem:[%s4 + $0x2b0] sm:$0xff]
    %v1502 = vld [vmem:[%s4 + $0x2b8] sm:$0xff]
    %v1503 = vld [vmem:[%s4 + $0x2c0] sm:$0xff]
    %v1504 = vld [vmem:[%s4 + $0x2c8] sm:$0xff]
    %v1505 = vld [vmem:[%s4 + $0x2d0] sm:$0xff]
    %v1506 = vld [vmem:[%s4 + $0x2d8] sm:$0xff]
    %v1507 = vld [vmem:[%s4 + $0x2e0] sm:$0xff]
    %v1508 = vld [vmem:[%s4 + $0x2e8] sm:$0xff]
    %v1509 = vld [vmem:[%s4 + $0x2f0] sm:$0xff]
    %v1510 = vld [vmem:[%s4 + $0x2f8] sm:$0xff]
    %vm1523 = vcmask 1041409
    %v1524 = vsel %vm1523, %v1379, %v1337
    %v1525 = vsel %vm1523, %v1386, %v1344
    %v1526 = vsel %vm1523, %v1393, %v1351
    %v1527 = vsel %vm1523, %v1400, %v1358
    %v1528 = vsel %vm1523, %v1407, %v1365
    %v1529 = vsel %vm1523, %v1414, %v1372
    %1536 = vmatprep.subr.mxu0 0.0
    %1537 = vmatpush1.msra.mxu0 %v1430
    %1538 = vmatprep.subr.mxu0 0.0
    %1539 = vmatpush1.msra.mxu0 %v1429
    %1540 = vmatprep.subr.mxu0 0.0
    %1541 = vmatpush1.msra.mxu0 %v1428
    %1542 = vmatprep.subr.mxu0 0.0
    %1543 = vmatpush1.msra.mxu0 %v1427
    %1544 = vmatprep.subr.mxu0 0.0
    %1545 = vmatpush1.msra.mxu0 %v1426
    %1546 = vmatprep.subr.mxu0 0.0
    %1547 = vmatpush1.msra.mxu0 %v1425
    %1548 = vmatprep.subr.mxu0 0.0
    %1549 = vmatpush1.msra.mxu0 %v1424
    %1550 = vmatprep.subr.mxu0 0.0
    %1551 = vmatpush1.msra.mxu0 %v1423
    %1552 = vmatprep.subr.mxu0 0.0
    %1553 = vmatpush1.msra.mxu0 %v1422
    %1554 = vmatprep.subr.mxu0 0.0
    %1555 = vmatpush1.msra.mxu0 %v1421
    %1556 = vmatprep.subr.mxu0 0.0
    %1557 = vmatpush1.msra.mxu0 %v1420
    %1558 = vmatprep.subr.mxu0 0.0
    %1559 = vmatpush1.msra.mxu0 %v1419
    %1560 = vmatprep.subr.mxu0 0.0
    %1561 = vmatpush1.msra.mxu0 %v1418
    %1562 = vmatprep.subr.mxu0 0.0
    %1563 = vmatpush1.msra.mxu0 %v1417
    %1564 = vmatprep.subr.mxu0 0.0
    %1565 = vmatpush1.msra.mxu0 %v1416
    %1566 = vmatprep.subr.mxu0 0.0
    %1567 = vmatpush1.msra.mxu0 %v1415
    %1568 = vmatprep.subr.mxu0 0.0
    %1569 = vmatpush2.msra.mxu0 %v1446
    %1570 = vmatprep.subr.mxu0 0.0
    %1571 = vmatpush2.msra.mxu0 %v1445
    %1572 = vmatprep.subr.mxu0 0.0
    %1573 = vmatpush2.msra.mxu0 %v1444
    %1574 = vmatprep.subr.mxu0 0.0
    %1575 = vmatpush2.msra.mxu0 %v1443
    %1576 = vmatprep.subr.mxu0 0.0
    %1577 = vmatpush2.msra.mxu0 %v1442
    %1578 = vmatprep.subr.mxu0 0.0
    %1579 = vmatpush2.msra.mxu0 %v1441
    %1580 = vmatprep.subr.mxu0 0.0
    %1581 = vmatpush2.msra.mxu0 %v1440
    %1582 = vmatprep.subr.mxu0 0.0
    %1583 = vmatpush2.msra.mxu0 %v1439
    %1584 = vmatprep.subr.mxu0 0.0
    %1585 = vmatpush2.msra.mxu0 %v1438
    %1586 = vmatprep.subr.mxu0 0.0
    %1587 = vmatpush2.msra.mxu0 %v1437
    %1588 = vmatprep.subr.mxu0 0.0
    %1589 = vmatpush2.msra.mxu0 %v1436
    %1590 = vmatprep.subr.mxu0 0.0
    %1591 = vmatpush2.msra.mxu0 %v1435
    %1592 = vmatprep.subr.mxu0 0.0
    %1593 = vmatpush2.msra.mxu0 %v1434
    %1594 = vmatprep.subr.mxu0 0.0
    %1595 = vmatpush2.msra.mxu0 %v1433
    %1596 = vmatprep.subr.mxu0 0.0
    %1597 = vmatpush2.msra.mxu0 %v1432
    %1598 = vmatprep.subr.mxu0 0.0
    %1599 = vmatpush2.msra.mxu0 %v1431
    %1600 = vmatprep.mubr.f32.mxu0 %v1525
    %1601 = vmatmul.mubr.f32.gmra.mxu0 %v1524
    %v1602 = vpop.f32.mrf.mxu0
    %v1603 = vadd.f32 0.0, %v1602
    %v1604 = vpop.f32.mrf.mxu0
    %1605 = vdwg.mxu0
    %1606 = vmatprep.subr.mxu0 0.0
    %1607 = vmatpush1.msra.mxu0 %v1462
    %1608 = vmatprep.subr.mxu0 0.0
    %1609 = vmatpush1.msra.mxu0 %v1461
    %1610 = vmatprep.subr.mxu0 0.0
    %1611 = vmatpush1.msra.mxu0 %v1460
    %1612 = vmatprep.subr.mxu0 0.0
    %1613 = vmatpush1.msra.mxu0 %v1459
    %1614 = vmatprep.subr.mxu0 0.0
    %1615 = vmatpush1.msra.mxu0 %v1458
    %1616 = vmatprep.subr.mxu0 0.0
    %1617 = vmatpush1.msra.mxu0 %v1457
    %1618 = vmatprep.subr.mxu0 0.0
    %1619 = vmatpush1.msra.mxu0 %v1456
    %1620 = vmatprep.subr.mxu0 0.0
    %1621 = vmatpush1.msra.mxu0 %v1455
    %1622 = vmatprep.subr.mxu0 0.0
    %1623 = vmatpush1.msra.mxu0 %v1454
    %1624 = vmatprep.subr.mxu0 0.0
    %1625 = vmatpush1.msra.mxu0 %v1453
    %1626 = vmatprep.subr.mxu0 0.0
    %1627 = vmatpush1.msra.mxu0 %v1452
    %1628 = vmatprep.subr.mxu0 0.0
    %1629 = vmatpush1.msra.mxu0 %v1451
    %1630 = vmatprep.subr.mxu0 0.0
    %1631 = vmatpush1.msra.mxu0 %v1450
    %1632 = vmatprep.subr.mxu0 0.0
    %1633 = vmatpush1.msra.mxu0 %v1449
    %1634 = vmatprep.subr.mxu0 0.0
    %1635 = vmatpush1.msra.mxu0 %v1448
    %1636 = vmatprep.subr.mxu0 0.0
    %1637 = vmatpush1.msra.mxu0 %v1447
    %1638 = vmatprep.subr.mxu0 0.0
    %1639 = vmatpush2.msra.mxu0 %v1478
    %1640 = vmatprep.subr.mxu0 0.0
    %1641 = vmatpush2.msra.mxu0 %v1477
    %1642 = vmatprep.subr.mxu0 0.0
    %1643 = vmatpush2.msra.mxu0 %v1476
    %1644 = vmatprep.subr.mxu0 0.0
    %1645 = vmatpush2.msra.mxu0 %v1475
    %1646 = vmatprep.subr.mxu0 0.0
    %1647 = vmatpush2.msra.mxu0 %v1474
    %1648 = vmatprep.subr.mxu0 0.0
    %1649 = vmatpush2.msra.mxu0 %v1473
    %1650 = vmatprep.subr.mxu0 0.0
    %1651 = vmatpush2.msra.mxu0 %v1472
    %1652 = vmatprep.subr.mxu0 0.0
    %1653 = vmatpush2.msra.mxu0 %v1471
    %1654 = vmatprep.subr.mxu0 0.0
    %1655 = vmatpush2.msra.mxu0 %v1470
    %1656 = vmatprep.subr.mxu0 0.0
    %1657 = vmatpush2.msra.mxu0 %v1469
    %1658 = vmatprep.subr.mxu0 0.0
    %1659 = vmatpush2.msra.mxu0 %v1468
    %1660 = vmatprep.subr.mxu0 0.0
    %1661 = vmatpush2.msra.mxu0 %v1467
    %1662 = vmatprep.subr.mxu0 0.0
    %1663 = vmatpush2.msra.mxu0 %v1466
    %1664 = vmatprep.subr.mxu0 0.0
    %1665 = vmatpush2.msra.mxu0 %v1465
    %1666 = vmatprep.subr.mxu0 0.0
    %1667 = vmatpush2.msra.mxu0 %v1464
    %1668 = vmatprep.subr.mxu0 0.0
    %1669 = vmatpush2.msra.mxu0 %v1463
    %1670 = vmatprep.mubr.f32.mxu0 %v1527
    %1671 = vmatmul.mubr.f32.gmra.mxu0 %v1526
    %v1672 = vpop.f32.mrf.mxu0
    %v1673 = vadd.f32 %v1603, %v1672
    %v1674 = vpop.f32.mrf.mxu0
    %1675 = vdwg.mxu0
    %1676 = vmatprep.subr.mxu0 0.0
    %1677 = vmatpush1.msra.mxu0 %v1494
    %1678 = vmatprep.subr.mxu0 0.0
    %1679 = vmatpush1.msra.mxu0 %v1493
    %1680 = vmatprep.subr.mxu0 0.0
    %1681 = vmatpush1.msra.mxu0 %v1492
    %1682 = vmatprep.subr.mxu0 0.0
    %1683 = vmatpush1.msra.mxu0 %v1491
    %1684 = vmatprep.subr.mxu0 0.0
    %1685 = vmatpush1.msra.mxu0 %v1490
    %1686 = vmatprep.subr.mxu0 0.0
    %1687 = vmatpush1.msra.mxu0 %v1489
    %1688 = vmatprep.subr.mxu0 0.0
    %1689 = vmatpush1.msra.mxu0 %v1488
    %1690 = vmatprep.subr.mxu0 0.0
    %1691 = vmatpush1.msra.mxu0 %v1487
    %1692 = vmatprep.subr.mxu0 0.0
    %1693 = vmatpush1.msra.mxu0 %v1486
    %1694 = vmatprep.subr.mxu0 0.0
    %1695 = vmatpush1.msra.mxu0 %v1485
    %1696 = vmatprep.subr.mxu0 0.0
    %1697 = vmatpush1.msra.mxu0 %v1484
    %1698 = vmatprep.subr.mxu0 0.0
    %1699 = vmatpush1.msra.mxu0 %v1483
    %1700 = vmatprep.subr.mxu0 0.0
    %1701 = vmatpush1.msra.mxu0 %v1482
    %1702 = vmatprep.subr.mxu0 0.0
    %1703 = vmatpush1.msra.mxu0 %v1481
    %1704 = vmatprep.subr.mxu0 0.0
    %1705 = vmatpush1.msra.mxu0 %v1480
    %1706 = vmatprep.subr.mxu0 0.0
    %1707 = vmatpush1.msra.mxu0 %v1479
    %1708 = vmatprep.subr.mxu0 0.0
    %1709 = vmatpush2.msra.mxu0 %v1510
    %1710 = vmatprep.subr.mxu0 0.0
    %1711 = vmatpush2.msra.mxu0 %v1509
    %1712 = vmatprep.subr.mxu0 0.0
    %1713 = vmatpush2.msra.mxu0 %v1508
    %1714 = vmatprep.subr.mxu0 0.0
    %1715 = vmatpush2.msra.mxu0 %v1507
    %1716 = vmatprep.subr.mxu0 0.0
    %1717 = vmatpush2.msra.mxu0 %v1506
    %1718 = vmatprep.subr.mxu0 0.0
    %1719 = vmatpush2.msra.mxu0 %v1505
    %1720 = vmatprep.subr.mxu0 0.0
    %1721 = vmatpush2.msra.mxu0 %v1504
    %1722 = vmatprep.subr.mxu0 0.0
    %1723 = vmatpush2.msra.mxu0 %v1503
    %1724 = vmatprep.subr.mxu0 0.0
    %1725 = vmatpush2.msra.mxu0 %v1502
    %1726 = vmatprep.subr.mxu0 0.0
    %1727 = vmatpush2.msra.mxu0 %v1501
    %1728 = vmatprep.subr.mxu0 0.0
    %1729 = vmatpush2.msra.mxu0 %v1500
    %1730 = vmatprep.subr.mxu0 0.0
    %1731 = vmatpush2.msra.mxu0 %v1499
    %1732 = vmatprep.subr.mxu0 0.0
    %1733 = vmatpush2.msra.mxu0 %v1498
    %1734 = vmatprep.subr.mxu0 0.0
    %1735 = vmatpush2.msra.mxu0 %v1497
    %1736 = vmatprep.subr.mxu0 0.0
    %1737 = vmatpush2.msra.mxu0 %v1496
    %1738 = vmatprep.subr.mxu0 0.0
    %1739 = vmatpush2.msra.mxu0 %v1495
    %1740 = vmatprep.mubr.f32.mxu0 %v1529
    %1741 = vmatmul.mubr.f32.gmra.mxu0 %v1528
    %v1742 = vpop.f32.mrf.mxu0
    %v1743 = vadd.f32 %v1673, %v1742
    %v1744 = vpop.f32.mrf.mxu0
    %1745 = vdwg.mxu0
    %v1746 = vld [vmem:[%s5] sm:$0xff]
    %v1747 = vld [vmem:[%s5 + $0x8] sm:$0xff]
    %v1748 = vld [vmem:[%s5 + $0x10] sm:$0xff]
    %v1749 = vld [vmem:[%s5 + $0x18] sm:$0xff]
    %vm1750 = vcmask 261120
    %v1752 = vsel %vm1750, %v1743, 0
    %1754 = vmatprep.subr.mxu0 0.0
    %1755 = vmatpush1.msra.mxu0 0.0
    %1756 = vmatprep.subr.mxu0 0.0
    %1757 = vmatpush1.msra.mxu0 0.0
    %1758 = vmatprep.subr.mxu0 0.0
    %1759 = vmatpush1.msra.mxu0 0.0
    %1760 = vmatprep.subr.mxu0 0.0
    %1761 = vmatpush1.msra.mxu0 0.0
    %1762 = vmatprep.subr.mxu0 0.0
    %1763 = vmatpush1.msra.mxu0 0.0
    %1764 = vmatprep.subr.mxu0 0.0
    %1765 = vmatpush1.msra.mxu0 0.0
    %1766 = vmatprep.subr.mxu0 0.0
    %1767 = vmatpush1.msra.mxu0 0.0
    %1768 = vmatprep.subr.mxu0 0.0
    %1769 = vmatpush1.msra.mxu0 0.0
    %1770 = vmatprep.subr.mxu0 0.0
    %1771 = vmatpush1.msra.mxu0 0.0
    %1772 = vmatprep.subr.mxu0 0.0
    %1773 = vmatpush1.msra.mxu0 0.0
    %1774 = vmatprep.subr.mxu0 0.0
    %1775 = vmatpush1.msra.mxu0 0.0
    %1776 = vmatprep.subr.mxu0 0.0
    %1777 = vmatpush1.msra.mxu0 0.0
    %1778 = vmatprep.subr.mxu0 0.0
    %1779 = vmatpush1.msra.mxu0 %v1749
    %1780 = vmatprep.subr.mxu0 0.0
    %1781 = vmatpush1.msra.mxu0 %v1748
    %1782 = vmatprep.subr.mxu0 0.0
    %1783 = vmatpush1.msra.mxu0 %v1747
    %1784 = vmatprep.subr.mxu0 0.0
    %1785 = vmatpush1.msra.mxu0 %v1746
    %1786 = vmatprep.subr.mxu0 0.0
    %1787 = vmatpush2.msra.mxu0 0.0
    %1788 = vmatprep.subr.mxu0 0.0
    %1789 = vmatpush2.msra.mxu0 0.0
    %1790 = vmatprep.subr.mxu0 0.0
    %1791 = vmatpush2.msra.mxu0 0.0
    %1792 = vmatprep.subr.mxu0 0.0
    %1793 = vmatpush2.msra.mxu0 0.0
    %1794 = vmatprep.subr.mxu0 0.0
    %1795 = vmatpush2.msra.mxu0 0.0
    %1796 = vmatprep.subr.mxu0 0.0
    %1797 = vmatpush2.msra.mxu0 0.0
    %1798 = vmatprep.subr.mxu0 0.0
    %1799 = vmatpush2.msra.mxu0 0.0
    %1800 = vmatprep.subr.mxu0 0.0
    %1801 = vmatpush2.msra.mxu0 0.0
    %1802 = vmatprep.subr.mxu0 0.0
    %1803 = vmatpush2.msra.mxu0 0.0
    %1804 = vmatprep.subr.mxu0 0.0
    %1805 = vmatpush2.msra.mxu0 0.0
    %1806 = vmatprep.subr.mxu0 0.0
    %1807 = vmatpush2.msra.mxu0 0.0
    %1808 = vmatprep.subr.mxu0 0.0
    %1809 = vmatpush2.msra.mxu0 0.0
    %1810 = vmatprep.subr.mxu0 0.0
    %1811 = vmatpush2.msra.mxu0 0.0
    %1812 = vmatprep.subr.mxu0 0.0
    %1813 = vmatpush2.msra.mxu0 0.0
    %1814 = vmatprep.subr.mxu0 0.0
    %1815 = vmatpush2.msra.mxu0 0.0
    %1816 = vmatprep.subr.mxu0 0.0
    %1817 = vmatpush2.msra.mxu0 0.0
    %1818 = vmatprep.mubr.f32.mxu0 0.0
    %1819 = vmatmul.mubr.f32.gmra.mxu0 %v1752
    %v1820 = vpop.f32.mrf.mxu0
    %v1821 = vadd.f32 0.0, %v1820
    %v1822 = vpop.f32.mrf.mxu0
    %1823 = vdwg.mxu0
    %v1824 = vmul.f32 %v1821, 0.5
    %v1825 = vmul.f32 %v1821, 0.70710677
    %v1826 = vmax.f32 %v1825, -4.0
    %v1827 = vmin.f32 %v1826, 4.0
    %v1828 = vmul.f32 %v1827, %v1827
    %v1829 = vmul.f32 %v1828, -2.7261424e-10
    %v1830 = vadd.f32 %v1829, 2.7706815e-08
    %v1831 = vmul.f32 %v1830, %v1828
    %v1832 = vadd.f32 %v1831, -2.101024e-06
    %v1833 = vmul.f32 %v1832, %v1828
    %v1834 = vadd.f32 %v1833, -5.6925062e-05
    %v1835 = vmul.f32 %v1834, %v1828
    %v1836 = vadd.f32 %v1835, -0.00073499064
    %v1837 = vmul.f32 %v1836, %v1828
    %v1838 = vadd.f32 %v1837, -0.0029546
    %v1839 = vmul.f32 %v1838, %v1828
    %v1840 = vadd.f32 %v1839, -0.016096033
    %v1841 = vmul.f32 %v1840, %v1827
    %v1842 = vmul.f32 %v1828, -1.45660715e-05
    %v1843 = vadd.f32 %v1842, -0.00021337405
    %v1844 = vmul.f32 %v1843, %v1828
    %v1845 = vadd.f32 %v1844, -0.001682827
    %v1846 = vmul.f32 %v1845, %v1828
    %v1847 = vadd.f32 %v1846, -0.0073733293
    %v1848 = vmul.f32 %v1847, %v1828
    %v1849 = vadd.f32 %v1848, -0.014264739
    %v1850 = vrcp.pop %v1849
    %v1851 = vmul.f32 %v1849, %v1850
    %v1852 = vsub.f32 2.0, %v1851
    %v1853 = vmul.f32 %v1850, %v1852
    %v1854 = vmul.f32 %v1841, %v1853
    %v1855 = vadd.f32 %v1854, 1.0
    %v1856 = vmul.f32 %v1824, %v1855
    %v1857 = vld [vmem:[%s6] sm:$0xff]
    %vm1858 = vcmask 64512
    %v1860 = vsel %vm1858, %v1856, 0
    %1862 = vmatprep.subr.mxu0 0.0
    %1863 = vmatpush1.msra.mxu0 0.0
    %1864 = vmatprep.subr.mxu0 0.0
    %1865 = vmatpush1.msra.mxu0 0.0
    %1866 = vmatprep.subr.mxu0 0.0
    %1867 = vmatpush1.msra.mxu0 0.0
    %1868 = vmatprep.subr.mxu0 0.0
    %1869 = vmatpush1.msra.mxu0 0.0
    %1870 = vmatprep.subr.mxu0 0.0
    %1871 = vmatpush1.msra.mxu0 0.0
    %1872 = vmatprep.subr.mxu0 0.0
    %1873 = vmatpush1.msra.mxu0 0.0
    %1874 = vmatprep.subr.mxu0 0.0
    %1875 = vmatpush1.msra.mxu0 0.0
    %1876 = vmatprep.subr.mxu0 0.0
    %1877 = vmatpush1.msra.mxu0 0.0
    %1878 = vmatprep.subr.mxu0 0.0
    %1879 = vmatpush1.msra.mxu0 0.0
    %1880 = vmatprep.subr.mxu0 0.0
    %1881 = vmatpush1.msra.mxu0 0.0
    %1882 = vmatprep.subr.mxu0 0.0
    %1883 = vmatpush1.msra.mxu0 0.0
    %1884 = vmatprep.subr.mxu0 0.0
    %1885 = vmatpush1.msra.mxu0 0.0
    %1886 = vmatprep.subr.mxu0 0.0
    %1887 = vmatpush1.msra.mxu0 0.0
    %1888 = vmatprep.subr.mxu0 0.0
    %1889 = vmatpush1.msra.mxu0 0.0
    %1890 = vmatprep.subr.mxu0 0.0
    %1891 = vmatpush1.msra.mxu0 0.0
    %1892 = vmatprep.subr.mxu0 0.0
    %1893 = vmatpush1.msra.mxu0 %v1857
    %1894 = vmatprep.subr.mxu0 0.0
    %1895 = vmatpush2.msra.mxu0 0.0
    %1896 = vmatprep.subr.mxu0 0.0
    %1897 = vmatpush2.msra.mxu0 0.0
    %1898 = vmatprep.subr.mxu0 0.0
    %1899 = vmatpush2.msra.mxu0 0.0
    %1900 = vmatprep.subr.mxu0 0.0
    %1901 = vmatpush2.msra.mxu0 0.0
    %1902 = vmatprep.subr.mxu0 0.0
    %1903 = vmatpush2.msra.mxu0 0.0
    %1904 = vmatprep.subr.mxu0 0.0
    %1905 = vmatpush2.msra.mxu0 0.0
    %1906 = vmatprep.subr.mxu0 0.0
    %1907 = vmatpush2.msra.mxu0 0.0
    %1908 = vmatprep.subr.mxu0 0.0
    %1909 = vmatpush2.msra.mxu0 0.0
    %1910 = vmatprep.subr.mxu0 0.0
    %1911 = vmatpush2.msra.mxu0 0.0
    %1912 = vmatprep.subr.mxu0 0.0
    %1913 = vmatpush2.msra.mxu0 0.0
    %1914 = vmatprep.subr.mxu0 0.0
    %1915 = vmatpush2.msra.mxu0 0.0
    %1916 = vmatprep.subr.mxu0 0.0
    %1917 = vmatpush2.msra.mxu0 0.0
    %1918 = vmatprep.subr.mxu0 0.0
    %1919 = vmatpush2.msra.mxu0 0.0
    %1920 = vmatprep.subr.mxu0 0.0
    %1921 = vmatpush2.msra.mxu0 0.0
    %1922 = vmatprep.subr.mxu0 0.0
    %1923 = vmatpush2.msra.mxu0 0.0
    %1924 = vmatprep.subr.mxu0 0.0
    %1925 = vmatpush2.msra.mxu0 0.0
    %1926 = vmatprep.mubr.f32.mxu0 0.0
    %1927 = vmatmul.mubr.f32.gmra.mxu0 %v1860
    %v1928 = vpop.f32.mrf.mxu0
    %v1929 = vadd.f32 0.0, %v1928
    %v1930 = vpop.f32.mrf.mxu0
    %1931 = vdwg.mxu0
    %v1932 = vxor.u32 %v1929, 2147483648
    %v1933 = vmul.f32 %v1932, 1.442695
    %v1934 = vpow.pop %v1933
    %v1935 = vadd.f32 %v1934, 1.0
    %v1936 = vrcp.pop %v1935
    %v1937 = vmul.f32 1.0, %v1936
    %v1938 = vmul.f32 %v1743, %v1937
    %vm1939 = vcmask 254976
    %1940 = vst.msk [vmem:[#allocation2] sm:$0x3] %vm1939, %v1938
    // Predicated region
    $region30: #{multiscale1d_block.1} parent=1 // pred_check
      _
    $region31: #{multiscale1d_block.1} parent=1 // pred_check_branch
      %1942 = sbr.rel (0) target = $region33
    $region32: #{multiscale1d_block.1} parent=1 // pred_region
      %s1944 = ssub.s32 32, 32
      %1945 = vsyncadd [#allocation3], %s1944
      %s1947 = sshll.u32 [#allocation2], 4
      %s1948 = int_to_ptr.vmem [resolvable:$true] %s1947
      %1950 = dma.vmem_to_hbm [thread:$0]  %s1948, 32, %s7, [#allocation3]
    $region33: #{multiscale1d_block.1} parent=1 // pred_fallthru
      _
    // Predicated region
    $region34: #{multiscale1d_block.1} parent=1 // pred_check
      _
    $region35: #{multiscale1d_block.1} parent=1 // pred_check_branch
      %1952 = sbr.rel (0) target = $region37
    $region36: #{multiscale1d_block.1} parent=1 // pred_region
      %1953 = dma.done [#allocation3], 32
    $region37: #{multiscale1d_block.1} parent=1 // pred_fallthru
      _
    %1954 = vsyncpa [#allocation3], 1

</llo_original>
